<compile_context>
chip_gen: v7x
topology: tpu7x:2x2x1
jax: 0.10.0
libtpu: 0.0.40
codegen_flags: <defaults>
</compile_context>

<pallas_src>
import functools
import math

import jax
import jax.numpy as jnp
from jax.experimental import pallas as pl
from jax.experimental.pallas import tpu as pltpu


def _encoder_layer_kernel(x_ref, mask_ref, gamma_ref, beta_ref,
                          wqkv_ref, bqkv_ref, wo_ref, bo_ref,
                          out_ref, *, num_heads, eps):
    # x_ref:    (1, S, D) f32   current batch element
    # mask_ref: (1, 1, S) int32 key-position mask (0 == masked out)
    # gamma/beta/bo: (1, D) f32 ; wqkv: (D, 3D) ; bqkv: (1, 3D) ; wo: (D, D)
    x = x_ref[0]                                   # (S, D)
    S, D = x.shape
    d_k = D // num_heads

    # ---- LayerNorm, PyTorch semantics: unbiased std (ddof=1), eps added to std ----
    mean = jnp.mean(x, axis=-1, keepdims=True)
    diff = x - mean
    var = jnp.sum(diff * diff, axis=-1, keepdims=True) * (1.0 / (D - 1))
    inv_std = 1.0 / (jnp.sqrt(var) + eps)
    y = gamma_ref[...] * (diff * inv_std) + beta_ref[...]          # (S, D)

    # ---- fused Q/K/V projection: single (S,D)x(D,3D) MXU matmul ----
    qkv = jnp.dot(y, wqkv_ref[...], preferred_element_type=jnp.float32) + bqkv_ref[...]
    q = qkv[:, 0:D]
    k = qkv[:, D:2 * D]
    v = qkv[:, 2 * D:3 * D]

    # ---- per-head scaled dot-product attention (static head loop, 2-D matmuls) ----
    masked = mask_ref[0] == 0                      # (1, S) bool, hoisted out of loop;
                                                   # broadcasts over query rows / heads
    inv_scale = jnp.float32(1.0 / math.sqrt(d_k))
    ctx_heads = []
    for h in range(num_heads):
        lo = h * d_k
        q_h = q[:, lo:lo + d_k]                    # (S, d_k)
        k_h = k[:, lo:lo + d_k]
        v_h = v[:, lo:lo + d_k]
        # q_h @ k_h^T without an explicit transpose (contract last dims).
        scores = jax.lax.dot_general(
            q_h, k_h, (((1,), (1,)), ((), ())),
            preferred_element_type=jnp.float32) * inv_scale        # (S, S)
        scores = jnp.where(masked, jnp.float32(-1e9), scores)
        s_max = jnp.max(scores, axis=-1, keepdims=True)
        e = jnp.exp(scores - s_max)
        p = e / jnp.sum(e, axis=-1, keepdims=True)                 # softmax
        ctx_heads.append(
            jnp.dot(p, v_h, preferred_element_type=jnp.float32))   # (S, d_k)
    ctx = jnp.concatenate(ctx_heads, axis=-1)                      # (S, D)

    # ---- output projection + residual ----
    # TODO(synk): nn.Dropout is identity in eval/inference mode; training-mode
    #             dropout (pltpu.prng_* based) is not implemented here.
    attn_out = jnp.dot(ctx, wo_ref[...], preferred_element_type=jnp.float32) + bo_ref[...]
    out_ref[0] = x + attn_out


def encoder_layer_forward(x, mask, params, *, num_heads, eps=1e-6):
    """x: (B, S, D) f32; mask: (B, 1, S) int32 (0 == masked). Returns (B, S, D) f32."""
    B, S, D = x.shape
    assert D % num_heads == 0

    # One-time weight layout prep: pack Q/K/V projections into a single fused matmul.
    w_qkv = jnp.concatenate([params["wq"], params["wk"], params["wv"]], axis=1)  # (D, 3D)
    b_qkv = jnp.concatenate([params["bq"], params["bk"], params["bv"]], axis=1)  # (1, 3D)

    kernel = functools.partial(_encoder_layer_kernel, num_heads=num_heads, eps=eps)

    const = lambda b: (0, 0)   # weights stay resident in VMEM across the batch grid
    grid_spec = pltpu.PrefetchScalarGridSpec(
        num_scalar_prefetch=0,
        grid=(B,),
        in_specs=[
            pl.BlockSpec((1, S, D), lambda b: (b, 0, 0)),   # x
            pl.BlockSpec((1, 1, S), lambda b: (b, 0, 0)),   # mask
            pl.BlockSpec((1, D), const),                    # gamma
            pl.BlockSpec((1, D), const),                    # beta
            pl.BlockSpec((D, 3 * D), const),                # W_qkv (fused)
            pl.BlockSpec((1, 3 * D), const),                # b_qkv (fused)
            pl.BlockSpec((D, D), const),                    # Wo
            pl.BlockSpec((1, D), const),                    # bo
        ],
        out_specs=pl.BlockSpec((1, S, D), lambda b: (b, 0, 0)),
    )

    return pl.pallas_call(
        kernel,
        out_shape=jax.ShapeDtypeStruct((B, S, D), jnp.float32),
        grid_spec=grid_spec,
        compiler_params=pltpu.CompilerParams(
            dimension_semantics=("parallel",),       # batch axis -> v7x 2-TC sharding
            vmem_limit_bytes=64 << 20),              # explicit VMEM budget
    )(x, mask,
      params["gamma"], params["beta"],
      w_qkv, b_qkv,
      params["wo"], params["bo"])


def encoder_layer_ref(x, mask, params, *, num_heads, eps=1e-6):
    """Pure-JAX reference replicating the PyTorch EncoderLayer forward (eval mode)."""
    B, S, D = x.shape
    d_k = D // num_heads
    mean = x.mean(-1, keepdims=True)
    diff = x - mean
    std = jnp.sqrt((diff * diff).sum(-1, keepdims=True) / (D - 1))   # unbiased std
    y = params["gamma"] * diff / (std + eps) + params["beta"]

    q = y @ params["wq"] + params["bq"]
    k = y @ params["wk"] + params["bk"]
    v = y @ params["wv"] + params["bv"]

    def split(t):
        return t.reshape(B, S, num_heads, d_k).transpose(0, 2, 1, 3)  # (B,H,S,d_k)

    qh, kh, vh = split(q), split(k), split(v)
    scores = jnp.einsum("bhqd,bhkd->bhqk", qh, kh) * (1.0 / math.sqrt(d_k))
    scores = jnp.where(mask[:, None, :, :] == 0, jnp.float32(-1e9), scores)
    s_max = jnp.max(scores, axis=-1, keepdims=True)
    e = jnp.exp(scores - s_max)
    p = e / jnp.sum(e, axis=-1, keepdims=True)
    ctx = jnp.einsum("bhqk,bhkd->bhqd", p, vh).transpose(0, 2, 1, 3).reshape(B, S, D)
    attn = ctx @ params["wo"] + params["bo"]
    return x + attn


if __name__ == "__main__":
    # Small deterministic setup consistent with the module's forward.
    B, S, D, H = 2, 8, 32, 4

    key = jax.random.PRNGKey(0)
    keys = jax.random.split(key, 9)

    x = jax.random.normal(keys[0], (B, S, D), dtype=jnp.float32)
    # Key-position mask (Annotated-Transformer style (B, 1, S)); mask out the last
    # two key positions of batch element 1.
    mask = jnp.ones((B, 1, S), dtype=jnp.int32)
    mask = mask.at[1, 0, S - 2:].set(0)

    def w(k):
        return jax.random.normal(k, (D, D), dtype=jnp.float32) * 0.1

    def b(k):
        return jax.random.normal(k, (1, D), dtype=jnp.float32) * 0.1

    params = dict(
        gamma=jnp.ones((1, D), jnp.float32),
        beta=jnp.zeros((1, D), jnp.float32),
        wq=w(keys[1]), bq=b(keys[2]),
        wk=w(keys[3]), bk=b(keys[4]),
        wv=w(keys[5]), bv=b(keys[6]),
        wo=w(keys[7]), bo=b(keys[8]),
    )

    out = encoder_layer_forward(x, mask, params, num_heads=H)
    out = jax.block_until_ready(out)

    ref = encoder_layer_ref(x, mask, params, num_heads=H)
    assert out.shape == (B, S, D)
    assert jnp.allclose(out, ref, atol=1e-4, rtol=1e-4), float(jnp.max(jnp.abs(out - ref)))

    print("KERNEL_OK")
</pallas_src>

<mosaic_0001>
module attributes {stable_mosaic.version = 11 : i64} {
  func.func @_encoder_layer_kernel(%arg0: i32, %arg1: memref<1x8x32xf32, #tpu.memory_space<vmem>>, %arg2: memref<1x1x8xi32, #tpu.memory_space<vmem>>, %arg3: memref<1x32xf32, #tpu.memory_space<vmem>>, %arg4: memref<1x32xf32, #tpu.memory_space<vmem>>, %arg5: memref<32x96xf32, #tpu.memory_space<vmem>>, %arg6: memref<1x96xf32, #tpu.memory_space<vmem>>, %arg7: memref<32x32xf32, #tpu.memory_space<vmem>>, %arg8: memref<1x32xf32, #tpu.memory_space<vmem>>, %arg9: memref<1x8x32xf32, #tpu.memory_space<vmem>>) attributes {dimension_semantics = [#tpu.dimension_semantics<parallel>], iteration_bounds = array<i64: 2>, scalar_prefetch = 0 : i64, scratch_operands = 0 : i64, tpu.core_type = #tpu.core_type<tc>, window_params = [{transform_indices = @transform_0, window_bounds = array<i64: 1, 8, 32>}, {transform_indices = @transform_1, window_bounds = array<i64: 1, 1, 8>}, {pipeline_mode = #tpu.pipeline_mode<synchronous>, transform_indices = @transform_2, window_bounds = array<i64: 1, 32>}, {pipeline_mode = #tpu.pipeline_mode<synchronous>, transform_indices = @transform_3, window_bounds = array<i64: 1, 32>}, {pipeline_mode = #tpu.pipeline_mode<synchronous>, transform_indices = @transform_4, window_bounds = array<i64: 32, 96>}, {pipeline_mode = #tpu.pipeline_mode<synchronous>, transform_indices = @transform_5, window_bounds = array<i64: 1, 96>}, {pipeline_mode = #tpu.pipeline_mode<synchronous>, transform_indices = @transform_6, window_bounds = array<i64: 32, 32>}, {pipeline_mode = #tpu.pipeline_mode<synchronous>, transform_indices = @transform_7, window_bounds = array<i64: 1, 32>}, {transform_indices = @transform_8, window_bounds = array<i64: 1, 8, 32>}]} {
    %c0 = arith.constant 0 : index
    %c0_0 = arith.constant 0 : index
    %c0_1 = arith.constant 0 : index
    %0 = vector.load %arg1[%c0, %c0_0, %c0_1] : memref<1x8x32xf32, #tpu.memory_space<vmem>>, vector<1x8x32xf32>
    %1 = vector.shape_cast %0 : vector<1x8x32xf32> to vector<8x32xf32>
    %cst = arith.constant dense<0.000000e+00> : vector<8xf32>
    %2 = vector.multi_reduction <add>, %1, %cst [1] : vector<8x32xf32> to vector<8xf32>
    %3 = vector.shape_cast %2 : vector<8xf32> to vector<8x1xf32>
    %cst_2 = arith.constant 3.200000e+01 : f32
    %4 = vector.broadcast %cst_2 : f32 to vector<8x1xf32>
    %5 = arith.divf %3, %4 : vector<8x1xf32>
    %6 = vector.broadcast %5 : vector<8x1xf32> to vector<8x32xf32>
    %7 = arith.subf %1, %6 : vector<8x32xf32>
    %8 = arith.mulf %7, %7 : vector<8x32xf32>
    %cst_3 = arith.constant dense<0.000000e+00> : vector<8xf32>
    %9 = vector.multi_reduction <add>, %8, %cst_3 [1] : vector<8x32xf32> to vector<8xf32>
    %10 = vector.shape_cast %9 : vector<8xf32> to vector<8x1xf32>
    %cst_4 = arith.constant 0.0322580636 : f32
    %11 = vector.broadcast %cst_4 : f32 to vector<8x1xf32>
    %12 = arith.mulf %10, %11 : vector<8x1xf32>
    %13 = math.sqrt %12 : vector<8x1xf32>
    %cst_5 = arith.constant 9.99999997E-7 : f32
    %14 = vector.broadcast %cst_5 : f32 to vector<8x1xf32>
    %15 = arith.addf %13, %14 : vector<8x1xf32>
    %cst_6 = arith.constant 1.000000e+00 : f32
    %16 = vector.broadcast %cst_6 : f32 to vector<8x1xf32>
    %17 = arith.divf %16, %15 : vector<8x1xf32>
    %c0_7 = arith.constant 0 : index
    %c0_8 = arith.constant 0 : index
    %18 = vector.load %arg3[%c0_7, %c0_8] : memref<1x32xf32, #tpu.memory_space<vmem>>, vector<1x32xf32>
    %19 = vector.broadcast %17 : vector<8x1xf32> to vector<8x32xf32>
    %20 = arith.mulf %7, %19 : vector<8x32xf32>
    %21 = vector.broadcast %18 : vector<1x32xf32> to vector<8x32xf32>
    %22 = arith.mulf %21, %20 : vector<8x32xf32>
    %c0_9 = arith.constant 0 : index
    %c0_10 = arith.constant 0 : index
    %23 = vector.load %arg4[%c0_9, %c0_10] : memref<1x32xf32, #tpu.memory_space<vmem>>, vector<1x32xf32>
    %24 = vector.broadcast %23 : vector<1x32xf32> to vector<8x32xf32>
    %25 = arith.addf %22, %24 : vector<8x32xf32>
    %c0_11 = arith.constant 0 : index
    %c0_12 = arith.constant 0 : index
    %26 = vector.load %arg5[%c0_11, %c0_12] : memref<32x96xf32, #tpu.memory_space<vmem>>, vector<32x96xf32>
    %cst_13 = arith.constant dense<0.000000e+00> : vector<8x96xf32>
    %27 = tpu.matmul %25, %26, %cst_13 {dimension_numbers = #tpu.dot_dimension_numbers<[1], [0], [0], [1], [0, 0, 1, 1], [], []>} : vector<8x32xf32>, vector<32x96xf32>, vector<8x96xf32> -> vector<8x96xf32>
    %c0_14 = arith.constant 0 : index
    %c0_15 = arith.constant 0 : index
    %28 = vector.load %arg6[%c0_14, %c0_15] : memref<1x96xf32, #tpu.memory_space<vmem>>, vector<1x96xf32>
    %29 = vector.broadcast %28 : vector<1x96xf32> to vector<8x96xf32>
    %30 = arith.addf %27, %29 : vector<8x96xf32>
    %31 = vector.extract_strided_slice %30 {offsets = [0, 0], sizes = [8, 32], strides = [1, 1]} : vector<8x96xf32> to vector<8x32xf32>
    %32 = vector.extract_strided_slice %30 {offsets = [0, 32], sizes = [8, 32], strides = [1, 1]} : vector<8x96xf32> to vector<8x32xf32>
    %33 = vector.extract_strided_slice %30 {offsets = [0, 64], sizes = [8, 32], strides = [1, 1]} : vector<8x96xf32> to vector<8x32xf32>
    %c0_16 = arith.constant 0 : index
    %c0_17 = arith.constant 0 : index
    %c0_18 = arith.constant 0 : index
    %34 = vector.load %arg2[%c0_16, %c0_17, %c0_18] : memref<1x1x8xi32, #tpu.memory_space<vmem>>, vector<1x1x8xi32>
    %35 = vector.shape_cast %34 : vector<1x1x8xi32> to vector<1x8xi32>
    %c0_i32 = arith.constant 0 : i32
    %36 = vector.broadcast %c0_i32 : i32 to vector<1x8xi32>
    %37 = arith.cmpi eq, %35, %36 : vector<1x8xi32>
    %38 = vector.extract_strided_slice %31 {offsets = [0, 0], sizes = [8, 8], strides = [1, 1]} : vector<8x32xf32> to vector<8x8xf32>
    %39 = vector.extract_strided_slice %32 {offsets = [0, 0], sizes = [8, 8], strides = [1, 1]} : vector<8x32xf32> to vector<8x8xf32>
    %40 = vector.extract_strided_slice %33 {offsets = [0, 0], sizes = [8, 8], strides = [1, 1]} : vector<8x32xf32> to vector<8x8xf32>
    %cst_19 = arith.constant dense<0.000000e+00> : vector<8x8xf32>
    %41 = tpu.matmul %38, %39, %cst_19 {dimension_numbers = #tpu.dot_dimension_numbers<[1], [1], [0], [0], [0, 0, 1, 0], [], []>} : vector<8x8xf32>, vector<8x8xf32>, vector<8x8xf32> -> vector<8x8xf32>
    %cst_20 = arith.constant 0.353553385 : f32
    %42 = vector.broadcast %cst_20 : f32 to vector<8x8xf32>
    %43 = arith.mulf %41, %42 : vector<8x8xf32>
    %cst_21 = arith.constant -1.000000e+09 : f32
    %44 = vector.shape_cast %37 : vector<1x8xi1> to vector<1x8xi1>
    %45 = vector.broadcast %44 : vector<1x8xi1> to vector<8x8xi1>
    %46 = vector.broadcast %cst_21 : f32 to vector<8x8xf32>
    %47 = arith.select %45, %46, %43 : vector<8x8xi1>, vector<8x8xf32>
    %cst_22 = arith.constant dense<0xFF800000> : vector<8xf32>
    %48 = vector.multi_reduction <maximumf>, %47, %cst_22 [1] : vector<8x8xf32> to vector<8xf32>
    %49 = vector.shape_cast %48 : vector<8xf32> to vector<8x1xf32>
    %50 = vector.broadcast %49 : vector<8x1xf32> to vector<8x8xf32>
    %51 = arith.subf %47, %50 : vector<8x8xf32>
    %52 = math.exp %51 : vector<8x8xf32>
    %cst_23 = arith.constant dense<0.000000e+00> : vector<8xf32>
    %53 = vector.multi_reduction <add>, %52, %cst_23 [1] : vector<8x8xf32> to vector<8xf32>
    %54 = vector.shape_cast %53 : vector<8xf32> to vector<8x1xf32>
    %55 = vector.broadcast %54 : vector<8x1xf32> to vector<8x8xf32>
    %56 = arith.divf %52, %55 : vector<8x8xf32>
    %cst_24 = arith.constant dense<0.000000e+00> : vector<8x8xf32>
    %57 = tpu.matmul %56, %40, %cst_24 {dimension_numbers = #tpu.dot_dimension_numbers<[1], [0], [0], [1], [0, 0, 1, 1], [], []>} : vector<8x8xf32>, vector<8x8xf32>, vector<8x8xf32> -> vector<8x8xf32>
    %58 = vector.extract_strided_slice %31 {offsets = [0, 8], sizes = [8, 8], strides = [1, 1]} : vector<8x32xf32> to vector<8x8xf32>
    %59 = vector.extract_strided_slice %32 {offsets = [0, 8], sizes = [8, 8], strides = [1, 1]} : vector<8x32xf32> to vector<8x8xf32>
    %60 = vector.extract_strided_slice %33 {offsets = [0, 8], sizes = [8, 8], strides = [1, 1]} : vector<8x32xf32> to vector<8x8xf32>
    %cst_25 = arith.constant dense<0.000000e+00> : vector<8x8xf32>
    %61 = tpu.matmul %58, %59, %cst_25 {dimension_numbers = #tpu.dot_dimension_numbers<[1], [1], [0], [0], [0, 0, 1, 0], [], []>} : vector<8x8xf32>, vector<8x8xf32>, vector<8x8xf32> -> vector<8x8xf32>
    %cst_26 = arith.constant 0.353553385 : f32
    %62 = vector.broadcast %cst_26 : f32 to vector<8x8xf32>
    %63 = arith.mulf %61, %62 : vector<8x8xf32>
    %cst_27 = arith.constant -1.000000e+09 : f32
    %64 = vector.shape_cast %37 : vector<1x8xi1> to vector<1x8xi1>
    %65 = vector.broadcast %64 : vector<1x8xi1> to vector<8x8xi1>
    %66 = vector.broadcast %cst_27 : f32 to vector<8x8xf32>
    %67 = arith.select %65, %66, %63 : vector<8x8xi1>, vector<8x8xf32>
    %cst_28 = arith.constant dense<0xFF800000> : vector<8xf32>
    %68 = vector.multi_reduction <maximumf>, %67, %cst_28 [1] : vector<8x8xf32> to vector<8xf32>
    %69 = vector.shape_cast %68 : vector<8xf32> to vector<8x1xf32>
    %70 = vector.broadcast %69 : vector<8x1xf32> to vector<8x8xf32>
    %71 = arith.subf %67, %70 : vector<8x8xf32>
    %72 = math.exp %71 : vector<8x8xf32>
    %cst_29 = arith.constant dense<0.000000e+00> : vector<8xf32>
    %73 = vector.multi_reduction <add>, %72, %cst_29 [1] : vector<8x8xf32> to vector<8xf32>
    %74 = vector.shape_cast %73 : vector<8xf32> to vector<8x1xf32>
    %75 = vector.broadcast %74 : vector<8x1xf32> to vector<8x8xf32>
    %76 = arith.divf %72, %75 : vector<8x8xf32>
    %cst_30 = arith.constant dense<0.000000e+00> : vector<8x8xf32>
    %77 = tpu.matmul %76, %60, %cst_30 {dimension_numbers = #tpu.dot_dimension_numbers<[1], [0], [0], [1], [0, 0, 1, 1], [], []>} : vector<8x8xf32>, vector<8x8xf32>, vector<8x8xf32> -> vector<8x8xf32>
    %78 = vector.extract_strided_slice %31 {offsets = [0, 16], sizes = [8, 8], strides = [1, 1]} : vector<8x32xf32> to vector<8x8xf32>
    %79 = vector.extract_strided_slice %32 {offsets = [0, 16], sizes = [8, 8], strides = [1, 1]} : vector<8x32xf32> to vector<8x8xf32>
    %80 = vector.extract_strided_slice %33 {offsets = [0, 16], sizes = [8, 8], strides = [1, 1]} : vector<8x32xf32> to vector<8x8xf32>
    %cst_31 = arith.constant dense<0.000000e+00> : vector<8x8xf32>
    %81 = tpu.matmul %78, %79, %cst_31 {dimension_numbers = #tpu.dot_dimension_numbers<[1], [1], [0], [0], [0, 0, 1, 0], [], []>} : vector<8x8xf32>, vector<8x8xf32>, vector<8x8xf32> -> vector<8x8xf32>
    %cst_32 = arith.constant 0.353553385 : f32
    %82 = vector.broadcast %cst_32 : f32 to vector<8x8xf32>
    %83 = arith.mulf %81, %82 : vector<8x8xf32>
    %cst_33 = arith.constant -1.000000e+09 : f32
    %84 = vector.shape_cast %37 : vector<1x8xi1> to vector<1x8xi1>
    %85 = vector.broadcast %84 : vector<1x8xi1> to vector<8x8xi1>
    %86 = vector.broadcast %cst_33 : f32 to vector<8x8xf32>
    %87 = arith.select %85, %86, %83 : vector<8x8xi1>, vector<8x8xf32>
    %cst_34 = arith.constant dense<0xFF800000> : vector<8xf32>
    %88 = vector.multi_reduction <maximumf>, %87, %cst_34 [1] : vector<8x8xf32> to vector<8xf32>
    %89 = vector.shape_cast %88 : vector<8xf32> to vector<8x1xf32>
    %90 = vector.broadcast %89 : vector<8x1xf32> to vector<8x8xf32>
    %91 = arith.subf %87, %90 : vector<8x8xf32>
    %92 = math.exp %91 : vector<8x8xf32>
    %cst_35 = arith.constant dense<0.000000e+00> : vector<8xf32>
    %93 = vector.multi_reduction <add>, %92, %cst_35 [1] : vector<8x8xf32> to vector<8xf32>
    %94 = vector.shape_cast %93 : vector<8xf32> to vector<8x1xf32>
    %95 = vector.broadcast %94 : vector<8x1xf32> to vector<8x8xf32>
    %96 = arith.divf %92, %95 : vector<8x8xf32>
    %cst_36 = arith.constant dense<0.000000e+00> : vector<8x8xf32>
    %97 = tpu.matmul %96, %80, %cst_36 {dimension_numbers = #tpu.dot_dimension_numbers<[1], [0], [0], [1], [0, 0, 1, 1], [], []>} : vector<8x8xf32>, vector<8x8xf32>, vector<8x8xf32> -> vector<8x8xf32>
    %98 = vector.extract_strided_slice %31 {offsets = [0, 24], sizes = [8, 8], strides = [1, 1]} : vector<8x32xf32> to vector<8x8xf32>
    %99 = vector.extract_strided_slice %32 {offsets = [0, 24], sizes = [8, 8], strides = [1, 1]} : vector<8x32xf32> to vector<8x8xf32>
    %100 = vector.extract_strided_slice %33 {offsets = [0, 24], sizes = [8, 8], strides = [1, 1]} : vector<8x32xf32> to vector<8x8xf32>
    %cst_37 = arith.constant dense<0.000000e+00> : vector<8x8xf32>
    %101 = tpu.matmul %98, %99, %cst_37 {dimension_numbers = #tpu.dot_dimension_numbers<[1], [1], [0], [0], [0, 0, 1, 0], [], []>} : vector<8x8xf32>, vector<8x8xf32>, vector<8x8xf32> -> vector<8x8xf32>
    %cst_38 = arith.constant 0.353553385 : f32
    %102 = vector.broadcast %cst_38 : f32 to vector<8x8xf32>
    %103 = arith.mulf %101, %102 : vector<8x8xf32>
    %cst_39 = arith.constant -1.000000e+09 : f32
    %104 = vector.shape_cast %37 : vector<1x8xi1> to vector<1x8xi1>
    %105 = vector.broadcast %104 : vector<1x8xi1> to vector<8x8xi1>
    %106 = vector.broadcast %cst_39 : f32 to vector<8x8xf32>
    %107 = arith.select %105, %106, %103 : vector<8x8xi1>, vector<8x8xf32>
    %cst_40 = arith.constant dense<0xFF800000> : vector<8xf32>
    %108 = vector.multi_reduction <maximumf>, %107, %cst_40 [1] : vector<8x8xf32> to vector<8xf32>
    %109 = vector.shape_cast %108 : vector<8xf32> to vector<8x1xf32>
    %110 = vector.broadcast %109 : vector<8x1xf32> to vector<8x8xf32>
    %111 = arith.subf %107, %110 : vector<8x8xf32>
    %112 = math.exp %111 : vector<8x8xf32>
    %cst_41 = arith.constant dense<0.000000e+00> : vector<8xf32>
    %113 = vector.multi_reduction <add>, %112, %cst_41 [1] : vector<8x8xf32> to vector<8xf32>
    %114 = vector.shape_cast %113 : vector<8xf32> to vector<8x1xf32>
    %115 = vector.broadcast %114 : vector<8x1xf32> to vector<8x8xf32>
    %116 = arith.divf %112, %115 : vector<8x8xf32>
    %cst_42 = arith.constant dense<0.000000e+00> : vector<8x8xf32>
    %117 = tpu.matmul %116, %100, %cst_42 {dimension_numbers = #tpu.dot_dimension_numbers<[1], [0], [0], [1], [0, 0, 1, 1], [], []>} : vector<8x8xf32>, vector<8x8xf32>, vector<8x8xf32> -> vector<8x8xf32>
    %118 = tpu.concatenate %57, %77, %97, %117 in 1 : vector<8x8xf32>, vector<8x8xf32>, vector<8x8xf32>, vector<8x8xf32> -> vector<8x32xf32>
    %c0_43 = arith.constant 0 : index
    %c0_44 = arith.constant 0 : index
    %119 = vector.load %arg7[%c0_43, %c0_44] : memref<32x32xf32, #tpu.memory_space<vmem>>, vector<32x32xf32>
    %cst_45 = arith.constant dense<0.000000e+00> : vector<8x32xf32>
    %120 = tpu.matmul %118, %119, %cst_45 {dimension_numbers = #tpu.dot_dimension_numbers<[1], [0], [0], [1], [0, 0, 1, 1], [], []>} : vector<8x32xf32>, vector<32x32xf32>, vector<8x32xf32> -> vector<8x32xf32>
    %c0_46 = arith.constant 0 : index
    %c0_47 = arith.constant 0 : index
    %121 = vector.load %arg8[%c0_46, %c0_47] : memref<1x32xf32, #tpu.memory_space<vmem>>, vector<1x32xf32>
    %122 = vector.broadcast %121 : vector<1x32xf32> to vector<8x32xf32>
    %123 = arith.addf %120, %122 : vector<8x32xf32>
    %124 = arith.addf %1, %123 : vector<8x32xf32>
    %c0_48 = arith.constant 0 : index
    %c0_49 = arith.constant 0 : index
    %c0_50 = arith.constant 0 : index
    %125 = vector.load %arg9[%c0_48, %c0_49, %c0_50] : memref<1x8x32xf32, #tpu.memory_space<vmem>>, vector<1x8x32xf32>
    %126 = vector.shape_cast %125 : vector<1x8x32xf32> to vector<8x32xf32>
    %127 = vector.shape_cast %124 : vector<8x32xf32> to vector<1x8x32xf32>
    tpu.vector_store %arg9[%c0_48, %c0_49, %c0_50], %127 {strides = array<i32>} : memref<1x8x32xf32, #tpu.memory_space<vmem>>, vector<1x8x32xf32>,
    return
  }
  func.func @transform_0(%arg0: i32) -> (i32, i32, i32) {
    %c0_i32 = arith.constant 0 : i32
    %c0_i32_0 = arith.constant 0 : i32
    %c0_i32_1 = arith.constant 0 : i32
    return %arg0, %c0_i32, %c0_i32_0 : i32, i32, i32
  }
  func.func @transform_1(%arg0: i32) -> (i32, i32, i32) {
    %c0_i32 = arith.constant 0 : i32
    %c0_i32_0 = arith.constant 0 : i32
    %c0_i32_1 = arith.constant 0 : i32
    return %arg0, %c0_i32, %c0_i32_0 : i32, i32, i32
  }
  func.func @transform_2(%arg0: i32) -> (i32, i32) {
    %c0_i32 = arith.constant 0 : i32
    %c0_i32_0 = arith.constant 0 : i32
    %c0_i32_1 = arith.constant 0 : i32
    return %c0_i32, %c0_i32_0 : i32, i32
  }
  func.func @transform_3(%arg0: i32) -> (i32, i32) {
    %c0_i32 = arith.constant 0 : i32
    %c0_i32_0 = arith.constant 0 : i32
    %c0_i32_1 = arith.constant 0 : i32
    return %c0_i32, %c0_i32_0 : i32, i32
  }
  func.func @transform_4(%arg0: i32) -> (i32, i32) {
    %c0_i32 = arith.constant 0 : i32
    %c0_i32_0 = arith.constant 0 : i32
    %c0_i32_1 = arith.constant 0 : i32
    return %c0_i32, %c0_i32_0 : i32, i32
  }
  func.func @transform_5(%arg0: i32) -> (i32, i32) {
    %c0_i32 = arith.constant 0 : i32
    %c0_i32_0 = arith.constant 0 : i32
    %c0_i32_1 = arith.constant 0 : i32
    return %c0_i32, %c0_i32_0 : i32, i32
  }
  func.func @transform_6(%arg0: i32) -> (i32, i32) {
    %c0_i32 = arith.constant 0 : i32
    %c0_i32_0 = arith.constant 0 : i32
    %c0_i32_1 = arith.constant 0 : i32
    return %c0_i32, %c0_i32_0 : i32, i32
  }
  func.func @transform_7(%arg0: i32) -> (i32, i32) {
    %c0_i32 = arith.constant 0 : i32
    %c0_i32_0 = arith.constant 0 : i32
    %c0_i32_1 = arith.constant 0 : i32
    return %c0_i32, %c0_i32_0 : i32, i32
  }
  func.func @transform_8(%arg0: i32) -> (i32, i32, i32) {
    %c0_i32 = arith.constant 0 : i32
    %c0_i32_0 = arith.constant 0 : i32
    %c0_i32_1 = arith.constant 0 : i32
    return %arg0, %c0_i32, %c0_i32_0 : i32, i32, i32
  }
}

</mosaic_0001>

<llo_original>
// kernel: tpu_custom_call.1
$region0: #{tpu_custom_call.1}
  #allocation0 [shape = 'u32[]', space=smem, size = 0x4, offset = 0x4, fixed_abs, tag = 'smem constant byte address 0x4 - core index']
  #allocation1 [shape = 'u32[144,128]{1,0:T(1,128)}', space=vmem, size = 0x12000, scoped, tag = 'internal scratch']
  %s0 = inlined_call_operand.hbm [shape: f32[2,8,32], index: 0, kind: input, shape index: {}]
  %s1 = inlined_call_operand.hbm [shape: s32[2,1,8], index: 1, kind: input, shape index: {}]
  %s2 = inlined_call_operand.hbm [shape: f32[1,32], index: 2, kind: input, shape index: {}]
  %s3 = inlined_call_operand.hbm [shape: f32[1,32], index: 3, kind: input, shape index: {}]
  %s4 = inlined_call_operand.hbm [shape: f32[32,96], index: 4, kind: input, shape index: {}]
  %s5 = inlined_call_operand.hbm [shape: f32[1,96], index: 5, kind: input, shape index: {}]
  %s6 = inlined_call_operand.hbm [shape: f32[32,32], index: 6, kind: input, shape index: {}]
  %s7 = inlined_call_operand.hbm [shape: f32[1,32], index: 7, kind: input, shape index: {}]
  %s8 = inlined_call_operand.hbm [shape: f32[2,8,32], index: 8, kind: output, shape index: {}]
  %s9 = sld [smem:[#allocation0]]
  $region97: #{tpu_custom_call.1} parent=0
    _
  %s11 = ssub.s32 1, %s9
  %s12 = scalar_select 0, %s11, %s9
  $region1: #{tpu_custom_call.1} parent=0
    #allocation2 [shape = 'u8[8192]{0}', space=vmem, size = 0x2000, scoped, tag = 'input window, operand 0']
    #allocation3 [shape = 's32[2]{0}', space=sflag, size = 0x8, scoped, tag = 'scoped memory for tpu_custom_call.1']
    #allocation4 [shape = 's32[2]{0}', space=sflag, size = 0x8, scoped, tag = 'scoped memory for tpu_custom_call.1']
    #allocation5 [shape = 'u8[1024]{0}', space=vmem, size = 0x400, scoped, tag = 'input window, operand 1']
    #allocation6 [shape = 's32[2]{0}', space=sflag, size = 0x8, scoped, tag = 'scoped memory for tpu_custom_call.1']
    #allocation7 [shape = 'u8[512]{0}', space=vmem, size = 0x400, scoped, tag = 'input window, operand 2, single buffered']
    #allocation8 [shape = 'u8[512]{0}', space=vmem, size = 0x400, scoped, tag = 'input window, operand 3, single buffered']
    #allocation9 [shape = 's32[1]{0}', space=sflag, size = 0x4, scoped, tag = 'scoped memory for tpu_custom_call.1']
    #allocation10 [shape = 'u8[16384]{0}', space=vmem, size = 0x4000, scoped, tag = 'input window, operand 4, single buffered']
    #allocation11 [shape = 'u8[512]{0}', space=vmem, size = 0x400, scoped, tag = 'input window, operand 5, single buffered']
    #allocation12 [shape = 's32[1]{0}', space=sflag, size = 0x4, scoped, tag = 'scoped memory for tpu_custom_call.1']
    #allocation13 [shape = 'u8[16384]{0}', space=vmem, size = 0x4000, scoped, tag = 'input window, operand 6, single buffered']
    #allocation14 [shape = 'u8[512]{0}', space=vmem, size = 0x400, scoped, tag = 'input window, operand 7, single buffered']
    #allocation15 [shape = 's32[1]{0}', space=sflag, size = 0x4, scoped, tag = 'scoped memory for tpu_custom_call.1']
    #allocation16 [shape = 'u8[8192]{0}', space=vmem, size = 0x2000, scoped, tag = 'output window, operand 0']
    %13 = vsyncpa [#allocation3], 0
    %s14 = scalar_lea.sflag [#allocation3], 1
    %15 = vsyncpa %s14, 0
    %16 = vsyncpa [#allocation6], 0
    %s17 = scalar_lea.sflag [#allocation6], 1
    %18 = vsyncpa %s17, 0
    %19 = vsyncpa [#allocation9], 0
    %20 = vsyncpa [#allocation12], 0
    %21 = vsyncpa [#allocation15], 0
    %22 = vsyncpa [#allocation4], 0
    %s23 = scalar_lea.sflag [#allocation4], 1
    %24 = vsyncpa %s23, 0
    loop: start=0, step=1, limit=4
    $region2: #{tpu_custom_call.1} parent=1 // loop_pre_header
      _
    $region3: #{tpu_custom_call.1} parent=1 // loop_header
      %s26 = sphi 0, %s30
      %p27 = scmp.ge.s32.totalorder %s26, 4
      %s36 = sphi 0, %s38
      %s39 = sphi 0, %s36
      %s40 = sphi 0, %s39
      %s56 = sphi 0, %s40
      %s62 = sphi 0, %s64
      %s65 = sphi 0, %s62
      %s66 = sphi 0, %s65
      %s82 = sphi 0, %s66
      %s86 = sphi 0, %s86
      %s88 = sphi 0, %s86
      %s89 = sphi 0, %s88
      %s103 = sphi 0, %s89
      %s107 = sphi 0, %s107
      %s109 = sphi 0, %s107
      %s110 = sphi 0, %s109
      %s124 = sphi 0, %s110
      %s128 = sphi 0, %s128
      %s130 = sphi 0, %s128
      %s131 = sphi 0, %s130
      %s145 = sphi 0, %s131
      %s149 = sphi 0, %s149
      %s151 = sphi 0, %s149
      %s152 = sphi 0, %s151
      %s166 = sphi 0, %s152
      %s170 = sphi 0, %s170
      %s172 = sphi 0, %s170
      %s173 = sphi 0, %s172
      %s187 = sphi 0, %s173
      %s191 = sphi 0, %s191
      %s193 = sphi 0, %s191
      %s194 = sphi 0, %s193
      %s208 = sphi 0, %s194
      %s214 = sphi 0, %s216
      %s217 = sphi 0, %s214
      %s218 = sphi 0, %s217
      %s234 = sphi 0, %s218
    $region4: #{tpu_custom_call.1} parent=1 // loop_header_branch
      %29 = sbr.rel (%p27) target = $region8
    $region5: #{tpu_custom_call.1} parent=1 // loop_body
      %s31 = ssub.s32 %s26, 1
      %s32 = ssub.s32 %s26, 2
      %s33 = sadd.s32 %s26, 1
      %s34 = ssub.s32 %s26, %s33
      %p35 = scmp.eq.s32.totalorder %s34, 0
      %s37 = sadd.s32 %s36, 1
      %s38 = scalar_select %p35, %s36, %s37
      %p41 = pneg %p35
      %p42 = scmp.eq.s32.totalorder %s26, 1
      %p43 = por %p41, %p42
      %p44 = scmp.ne.s32.totalorder %s36, %s39
      %p45 = scmp.eq.s32.totalorder %s26, 0
      %p46 = por %p44, %p45
      %p47 = scmp.ne.s32.totalorder %s36, %s39
      %p48 = scmp.eq.s32.totalorder %s31, 1
      %p49 = por %p47, %p48
      %p50 = scmp.ne.s32.totalorder %s39, %s40
      %p51 = scmp.eq.s32.totalorder %s31, 0
      %p52 = por %p50, %p51
      %p53 = scmp.ne.s32.totalorder %s39, %s40
      %p54 = scmp.eq.s32.totalorder %s32, 1
      %p55 = por %p53, %p54
      %p57 = scmp.ne.s32.totalorder %s40, %s56
      %p58 = scmp.eq.s32.totalorder %s32, 0
      %p59 = por %p57, %p58
      %s60 = ssub.s32 %s26, %s33
      %p61 = scmp.eq.s32.totalorder %s60, 0
      %s63 = sadd.s32 %s62, 1
      %s64 = scalar_select %p61, %s62, %s63
      %p67 = pneg %p61
      %p68 = scmp.eq.s32.totalorder %s26, 1
      %p69 = por %p67, %p68
      %p70 = scmp.ne.s32.totalorder %s62, %s65
      %p71 = scmp.eq.s32.totalorder %s26, 0
      %p72 = por %p70, %p71
      %p73 = scmp.ne.s32.totalorder %s62, %s65
      %p74 = scmp.eq.s32.totalorder %s31, 1
      %p75 = por %p73, %p74
      %p76 = scmp.ne.s32.totalorder %s65, %s66
      %p77 = scmp.eq.s32.totalorder %s31, 0
      %p78 = por %p76, %p77
      %p79 = scmp.ne.s32.totalorder %s65, %s66
      %p80 = scmp.eq.s32.totalorder %s32, 1
      %p81 = por %p79, %p80
      %p83 = scmp.ne.s32.totalorder %s66, %s82
      %p84 = scmp.eq.s32.totalorder %s32, 0
      %p85 = por %p83, %p84
      %s87 = sadd.s32 %s86, 1
      %p90 = scmp.eq.s32.totalorder %s26, 1
      %p91 = scmp.ne.s32.totalorder %s86, %s88
      %p92 = scmp.eq.s32.totalorder %s26, 0
      %p93 = por %p91, %p92
      %p94 = scmp.ne.s32.totalorder %s86, %s88
      %p95 = scmp.eq.s32.totalorder %s31, 1
      %p96 = por %p94, %p95
      %p97 = scmp.ne.s32.totalorder %s88, %s89
      %p98 = scmp.eq.s32.totalorder %s31, 0
      %p99 = por %p97, %p98
      %p100 = scmp.ne.s32.totalorder %s88, %s89
      %p101 = scmp.eq.s32.totalorder %s32, 1
      %p102 = por %p100, %p101
      %p104 = scmp.ne.s32.totalorder %s89, %s103
      %p105 = scmp.eq.s32.totalorder %s32, 0
      %p106 = por %p104, %p105
      %s108 = sadd.s32 %s107, 1
      %p111 = scmp.eq.s32.totalorder %s26, 1
      %p112 = scmp.ne.s32.totalorder %s107, %s109
      %p113 = scmp.eq.s32.totalorder %s26, 0
      %p114 = por %p112, %p113
      %p115 = scmp.ne.s32.totalorder %s107, %s109
      %p116 = scmp.eq.s32.totalorder %s31, 1
      %p117 = por %p115, %p116
      %p118 = scmp.ne.s32.totalorder %s109, %s110
      %p119 = scmp.eq.s32.totalorder %s31, 0
      %p120 = por %p118, %p119
      %p121 = scmp.ne.s32.totalorder %s109, %s110
      %p122 = scmp.eq.s32.totalorder %s32, 1
      %p123 = por %p121, %p122
      %p125 = scmp.ne.s32.totalorder %s110, %s124
      %p126 = scmp.eq.s32.totalorder %s32, 0
      %p127 = por %p125, %p126
      %s129 = sadd.s32 %s128, 1
      %p132 = scmp.eq.s32.totalorder %s26, 1
      %p133 = scmp.ne.s32.totalorder %s128, %s130
      %p134 = scmp.eq.s32.totalorder %s26, 0
      %p135 = por %p133, %p134
      %p136 = scmp.ne.s32.totalorder %s128, %s130
      %p137 = scmp.eq.s32.totalorder %s31, 1
      %p138 = por %p136, %p137
      %p139 = scmp.ne.s32.totalorder %s130, %s131
      %p140 = scmp.eq.s32.totalorder %s31, 0
      %p141 = por %p139, %p140
      %p142 = scmp.ne.s32.totalorder %s130, %s131
      %p143 = scmp.eq.s32.totalorder %s32, 1
      %p144 = por %p142, %p143
      %p146 = scmp.ne.s32.totalorder %s131, %s145
      %p147 = scmp.eq.s32.totalorder %s32, 0
      %p148 = por %p146, %p147
      %s150 = sadd.s32 %s149, 1
      %p153 = scmp.eq.s32.totalorder %s26, 1
      %p154 = scmp.ne.s32.totalorder %s149, %s151
      %p155 = scmp.eq.s32.totalorder %s26, 0
      %p156 = por %p154, %p155
      %p157 = scmp.ne.s32.totalorder %s149, %s151
      %p158 = scmp.eq.s32.totalorder %s31, 1
      %p159 = por %p157, %p158
      %p160 = scmp.ne.s32.totalorder %s151, %s152
      %p161 = scmp.eq.s32.totalorder %s31, 0
      %p162 = por %p160, %p161
      %p163 = scmp.ne.s32.totalorder %s151, %s152
      %p164 = scmp.eq.s32.totalorder %s32, 1
      %p165 = por %p163, %p164
      %p167 = scmp.ne.s32.totalorder %s152, %s166
      %p168 = scmp.eq.s32.totalorder %s32, 0
      %p169 = por %p167, %p168
      %s171 = sadd.s32 %s170, 1
      %p174 = scmp.eq.s32.totalorder %s26, 1
      %p175 = scmp.ne.s32.totalorder %s170, %s172
      %p176 = scmp.eq.s32.totalorder %s26, 0
      %p177 = por %p175, %p176
      %p178 = scmp.ne.s32.totalorder %s170, %s172
      %p179 = scmp.eq.s32.totalorder %s31, 1
      %p180 = por %p178, %p179
      %p181 = scmp.ne.s32.totalorder %s172, %s173
      %p182 = scmp.eq.s32.totalorder %s31, 0
      %p183 = por %p181, %p182
      %p184 = scmp.ne.s32.totalorder %s172, %s173
      %p185 = scmp.eq.s32.totalorder %s32, 1
      %p186 = por %p184, %p185
      %p188 = scmp.ne.s32.totalorder %s173, %s187
      %p189 = scmp.eq.s32.totalorder %s32, 0
      %p190 = por %p188, %p189
      %s192 = sadd.s32 %s191, 1
      %p195 = scmp.eq.s32.totalorder %s26, 1
      %p196 = scmp.ne.s32.totalorder %s191, %s193
      %p197 = scmp.eq.s32.totalorder %s26, 0
      %p198 = por %p196, %p197
      %p199 = scmp.ne.s32.totalorder %s191, %s193
      %p200 = scmp.eq.s32.totalorder %s31, 1
      %p201 = por %p199, %p200
      %p202 = scmp.ne.s32.totalorder %s193, %s194
      %p203 = scmp.eq.s32.totalorder %s31, 0
      %p204 = por %p202, %p203
      %p205 = scmp.ne.s32.totalorder %s193, %s194
      %p206 = scmp.eq.s32.totalorder %s32, 1
      %p207 = por %p205, %p206
      %p209 = scmp.ne.s32.totalorder %s194, %s208
      %p210 = scmp.eq.s32.totalorder %s32, 0
      %p211 = por %p209, %p210
      %s212 = ssub.s32 %s26, %s33
      %p213 = scmp.eq.s32.totalorder %s212, 0
      %s215 = sadd.s32 %s214, 1
      %s216 = scalar_select %p213, %s214, %s215
      %p219 = pneg %p213
      %p220 = scmp.eq.s32.totalorder %s26, 1
      %p221 = por %p219, %p220
      %p222 = scmp.ne.s32.totalorder %s214, %s217
      %p223 = scmp.eq.s32.totalorder %s26, 0
      %p224 = por %p222, %p223
      %p225 = scmp.ne.s32.totalorder %s214, %s217
      %p226 = scmp.eq.s32.totalorder %s31, 1
      %p227 = por %p225, %p226
      %p228 = scmp.ne.s32.totalorder %s217, %s218
      %p229 = scmp.eq.s32.totalorder %s31, 0
      %p230 = por %p228, %p229
      %p231 = scmp.ne.s32.totalorder %s217, %s218
      %p232 = scmp.eq.s32.totalorder %s32, 1
      %p233 = por %p231, %p232
      %p235 = scmp.ne.s32.totalorder %s218, %s234
      %p236 = scmp.eq.s32.totalorder %s32, 0
      %p237 = por %p235, %p236
      %p238 = scmp.le.s32.totalorder 1, %s26
      %p239 = scmp.lt.s32.totalorder %s26, 3
      %p240 = pnand %p238, %p239
      %p241 = pneg %p240
      // Predicated region
      $region9: #{tpu_custom_call.1} parent=5 // pred_check
        _
      $region10: #{tpu_custom_call.1} parent=5 // pred_check_branch
        %243 = sbr.rel (%p240) target = $region12
      $region11: #{tpu_custom_call.1} parent=5 // pred_region
        %s244 = ssub.s32 %s26, 1
        // Predicated region
        $region13: #{tpu_custom_call.1} parent=11 // pred_check
          %p245 = pneg %p99
        $region14: #{tpu_custom_call.1} parent=11 // pred_check_branch
          %247 = sbr.rel (%p245) target = $region16
        $region15: #{tpu_custom_call.1} parent=11 // pred_region
          %s249 = ssub.s32 16, 16
          %250 = vsyncadd [#allocation6], %s249
          %s252 = sshll.u32 [#allocation7], 4
          %s253 = int_to_ptr.vmem [resolvable:$true] %s252
          %255 = dma.hbm_to_vmem [thread:$0]  %s2, 16, %s253, [#allocation6]
        $region16: #{tpu_custom_call.1} parent=11 // pred_fallthru
          _
        // Predicated region
        $region17: #{tpu_custom_call.1} parent=11 // pred_check
          %p256 = pneg %p120
        $region18: #{tpu_custom_call.1} parent=11 // pred_check_branch
          %258 = sbr.rel (%p256) target = $region20
        $region19: #{tpu_custom_call.1} parent=11 // pred_region
          %s260 = ssub.s32 16, 16
          %261 = vsyncadd [#allocation9], %s260
          %s263 = sshll.u32 [#allocation8], 4
          %s264 = int_to_ptr.vmem [resolvable:$true] %s263
          %266 = dma.hbm_to_vmem [thread:$0]  %s3, 16, %s264, [#allocation9]
        $region20: #{tpu_custom_call.1} parent=11 // pred_fallthru
          _
        // Predicated region
        $region21: #{tpu_custom_call.1} parent=11 // pred_check
          %p267 = pneg %p141
        $region22: #{tpu_custom_call.1} parent=11 // pred_check_branch
          %269 = sbr.rel (%p267) target = $region24
        $region23: #{tpu_custom_call.1} parent=11 // pred_region
          %s271 = ssub.s32 512, 512
          %272 = vsyncadd [#allocation9], %s271
          %s273 = sshll.u32 [#allocation10], 4
          %s274 = int_to_ptr.vmem [resolvable:$true] %s273
          %279 = dma.hbm_to_vmem [thread:$0]  %s4, 512, %s274, [#allocation9], 128, 128, 8
        $region24: #{tpu_custom_call.1} parent=11 // pred_fallthru
          _
        // Predicated region
        $region25: #{tpu_custom_call.1} parent=11 // pred_check
          %p280 = pneg %p162
        $region26: #{tpu_custom_call.1} parent=11 // pred_check_branch
          %282 = sbr.rel (%p280) target = $region28
        $region27: #{tpu_custom_call.1} parent=11 // pred_region
          %s284 = ssub.s32 16, 16
          %285 = vsyncadd [#allocation12], %s284
          %s287 = sshll.u32 [#allocation11], 4
          %s288 = int_to_ptr.vmem [resolvable:$true] %s287
          %290 = dma.hbm_to_vmem [thread:$0]  %s5, 16, %s288, [#allocation12]
        $region28: #{tpu_custom_call.1} parent=11 // pred_fallthru
          _
        // Predicated region
        $region29: #{tpu_custom_call.1} parent=11 // pred_check
          %p291 = pneg %p183
        $region30: #{tpu_custom_call.1} parent=11 // pred_check_branch
          %293 = sbr.rel (%p291) target = $region32
        $region31: #{tpu_custom_call.1} parent=11 // pred_region
          %s295 = ssub.s32 512, 512
          %296 = vsyncadd [#allocation12], %s295
          %s297 = sshll.u32 [#allocation13], 4
          %s298 = int_to_ptr.vmem [resolvable:$true] %s297
          %303 = dma.hbm_to_vmem [thread:$0]  %s6, 512, %s298, [#allocation12], 128, 128, 8
        $region32: #{tpu_custom_call.1} parent=11 // pred_fallthru
          _
        // Predicated region
        $region33: #{tpu_custom_call.1} parent=11 // pred_check
          %p304 = pneg %p204
        $region34: #{tpu_custom_call.1} parent=11 // pred_check_branch
          %306 = sbr.rel (%p304) target = $region36
        $region35: #{tpu_custom_call.1} parent=11 // pred_region
          %s308 = ssub.s32 16, 16
          %309 = vsyncadd [#allocation15], %s308
          %s311 = sshll.u32 [#allocation14], 4
          %s312 = int_to_ptr.vmem [resolvable:$true] %s311
          %314 = dma.hbm_to_vmem [thread:$0]  %s7, 16, %s312, [#allocation15]
        $region36: #{tpu_custom_call.1} parent=11 // pred_fallthru
          _
      $region12: #{tpu_custom_call.1} parent=5 // pred_fallthru
        _
      %p315 = scmp.lt.s32.totalorder %s26, 2
      // Predicated region
      $region37: #{tpu_custom_call.1} parent=5 // pred_check
        %p316 = pneg %p315
      $region38: #{tpu_custom_call.1} parent=5 // pred_check_branch
        %318 = sbr.rel (%p316) target = $region40
      $region39: #{tpu_custom_call.1} parent=5 // pred_region
        // Predicated region
        $region41: #{tpu_custom_call.1} parent=39 // pred_check
          %p319 = pneg %p46
        $region42: #{tpu_custom_call.1} parent=39 // pred_check_branch
          %321 = sbr.rel (%p319) target = $region44
        $region43: #{tpu_custom_call.1} parent=39 // pred_region
          %s322 = sand.u32 %s36, 1
          %s323 = scalar_lea.sflag [#allocation3], %s322
          %s324 = sand.u32 %s36, 1
          %s325 = smul.addr %s324, 8
          %s326 = scalar_lea.vmem [#allocation2], %s325
          %s328 = ssub.s32 128, 128
          %329 = vsyncadd %s323, %s328
          %s330 = smul.addr %s26, 128
          %s331 = scalar_lea.hbm %s0, %s330
          %s333 = sshll.u32 %s326, 4
          %s334 = int_to_ptr.vmem [resolvable:$true] %s333
          %336 = dma.hbm_to_vmem [thread:$0]  %s331, 128, %s334, %s323
        $region44: #{tpu_custom_call.1} parent=39 // pred_fallthru
          _
        // Predicated region
        $region45: #{tpu_custom_call.1} parent=39 // pred_check
          %p337 = pneg %p72
        $region46: #{tpu_custom_call.1} parent=39 // pred_check_branch
          %339 = sbr.rel (%p337) target = $region48
        $region47: #{tpu_custom_call.1} parent=39 // pred_region
          %s340 = sand.u32 %s26, 1
          %s341 = scalar_lea.sflag [#allocation6], %s340
          %s342 = sand.u32 %s62, 1
          %s343 = scalar_lea.vmem [#allocation5], %s342
          %s345 = ssub.s32 16, 16
          %346 = vsyncadd %s341, %s345
          %s347 = smul.addr %s26, 16
          %s348 = scalar_lea.hbm %s1, %s347
          %s350 = sshll.u32 %s343, 4
          %s351 = int_to_ptr.vmem [resolvable:$true] %s350
          %353 = dma.hbm_to_vmem [thread:$0]  %s348, 16, %s351, %s341
        $region48: #{tpu_custom_call.1} parent=39 // pred_fallthru
          _
      $region40: #{tpu_custom_call.1} parent=5 // pred_fallthru
        _
      %p354 = scmp.le.s32.totalorder 1, %s26
      %p355 = scmp.lt.s32.totalorder %s26, 3
      %p356 = pnand %p354, %p355
      %p357 = pneg %p356
      // Predicated region
      $region49: #{tpu_custom_call.1} parent=5 // pred_check
        _
      $region50: #{tpu_custom_call.1} parent=5 // pred_check_branch
        %359 = sbr.rel (%p356) target = $region52
      $region51: #{tpu_custom_call.1} parent=5 // pred_region
        %s360 = ssub.s32 %s26, 1
        %s361 = sand.u32 %s39, 1
        %s362 = scalar_lea.sflag [#allocation3], %s361
        %s363 = sand.u32 %s39, 1
        %s364 = smul.addr %s363, 8
        %s365 = scalar_lea.vmem [#allocation2], %s364
        // Predicated region
        $region53: #{tpu_custom_call.1} parent=51 // pred_check
          %p366 = pneg %p52
        $region54: #{tpu_custom_call.1} parent=51 // pred_check_branch
          %368 = sbr.rel (%p366) target = $region56
        $region55: #{tpu_custom_call.1} parent=51 // pred_region
          %369 = dma.done %s362, 128
        $region56: #{tpu_custom_call.1} parent=51 // pred_fallthru
          _
        %s370 = sand.u32 %s31, 1
        %s371 = scalar_lea.sflag [#allocation6], %s370
        %s372 = sand.u32 %s65, 1
        %s373 = scalar_lea.vmem [#allocation5], %s372
        // Predicated region
        $region57: #{tpu_custom_call.1} parent=51 // pred_check
          %p374 = pneg %p78
        $region58: #{tpu_custom_call.1} parent=51 // pred_check_branch
          %376 = sbr.rel (%p374) target = $region60
        $region59: #{tpu_custom_call.1} parent=51 // pred_region
          %377 = dma.done %s371, 16
        $region60: #{tpu_custom_call.1} parent=51 // pred_fallthru
          _
        // Predicated region
        $region61: #{tpu_custom_call.1} parent=51 // pred_check
          %p378 = pneg %p99
        $region62: #{tpu_custom_call.1} parent=51 // pred_check_branch
          %380 = sbr.rel (%p378) target = $region64
        $region63: #{tpu_custom_call.1} parent=51 // pred_region
          %381 = dma.done [#allocation6], 16
        $region64: #{tpu_custom_call.1} parent=51 // pred_fallthru
          _
        // Predicated region
        $region65: #{tpu_custom_call.1} parent=51 // pred_check
          %p382 = pneg %p120
        $region66: #{tpu_custom_call.1} parent=51 // pred_check_branch
          %384 = sbr.rel (%p382) target = $region68
        $region67: #{tpu_custom_call.1} parent=51 // pred_region
          %385 = dma.done [#allocation9], 16
        $region68: #{tpu_custom_call.1} parent=51 // pred_fallthru
          _
        // Predicated region
        $region69: #{tpu_custom_call.1} parent=51 // pred_check
          %p386 = pneg %p141
        $region70: #{tpu_custom_call.1} parent=51 // pred_check_branch
          %388 = sbr.rel (%p386) target = $region72
        $region71: #{tpu_custom_call.1} parent=51 // pred_region
          %389 = dma.done [#allocation9], 512
        $region72: #{tpu_custom_call.1} parent=51 // pred_fallthru
          _
        // Predicated region
        $region73: #{tpu_custom_call.1} parent=51 // pred_check
          %p390 = pneg %p162
        $region74: #{tpu_custom_call.1} parent=51 // pred_check_branch
          %392 = sbr.rel (%p390) target = $region76
        $region75: #{tpu_custom_call.1} parent=51 // pred_region
          %393 = dma.done [#allocation12], 16
        $region76: #{tpu_custom_call.1} parent=51 // pred_fallthru
          _
        // Predicated region
        $region77: #{tpu_custom_call.1} parent=51 // pred_check
          %p394 = pneg %p183
        $region78: #{tpu_custom_call.1} parent=51 // pred_check_branch
          %396 = sbr.rel (%p394) target = $region80
        $region79: #{tpu_custom_call.1} parent=51 // pred_region
          %397 = dma.done [#allocation12], 512
        $region80: #{tpu_custom_call.1} parent=51 // pred_fallthru
          _
        // Predicated region
        $region81: #{tpu_custom_call.1} parent=51 // pred_check
          %p398 = pneg %p204
        $region82: #{tpu_custom_call.1} parent=51 // pred_check_branch
          %400 = sbr.rel (%p398) target = $region84
        $region83: #{tpu_custom_call.1} parent=51 // pred_region
          %401 = dma.done [#allocation15], 16
        $region84: #{tpu_custom_call.1} parent=51 // pred_fallthru
          _
        %s402 = sand.u32 %s39, 1
        %s403 = scalar_lea.sflag [#allocation3], %s402
        %s404 = sand.u32 %s39, 1
        %s405 = smul.addr %s404, 8
        %s406 = scalar_lea.vmem [#allocation2], %s405
        %p407 = pneg %p52
        %p408 = pneg %p49
        %s409 = sand.u32 %s31, 1
        %s410 = scalar_lea.sflag [#allocation6], %s409
        %s411 = sand.u32 %s65, 1
        %s412 = scalar_lea.vmem [#allocation5], %s411
        %p413 = pneg %p78
        %p414 = pneg %p75
        %p415 = pneg %p99
        %p416 = pneg %p96
        %p417 = pneg %p120
        %p418 = pneg %p117
        %p419 = pneg %p141
        %p420 = pneg %p138
        %p421 = pneg %p162
        %p422 = pneg %p159
        %p423 = pneg %p183
        %p424 = pneg %p180
        %p425 = pneg %p204
        %p426 = pneg %p201
        %p427 = pneg %p230
        %p428 = pneg %p227
        %s429 = sand.u32 %s217, 1
        %s430 = scalar_lea.sflag [#allocation4], %s429
        %s431 = sand.u32 %s217, 1
        %s432 = smul.addr %s431, 8
        %s433 = scalar_lea.vmem [#allocation16], %s432
        %v434 = vld [vmem:[%s365] sm:$0xff]
        %vm435 = vcmask 261120
        %v436 = vsel %vm435, %v434, 0.0
        %437 = vadd.xlane.f32.xlu0 %v436
        %v438 = vpop.xlane.xlu0 %437
        %v439 = vrcp.pop 32.0
        %v440 = vmul.f32 %v438, %v439
        %v441 = vsub.f32 %v434, %v440
        %v442 = vmul.f32 %v441, %v441
        %v443 = vsel %vm435, %v442, 0.0
        %444 = vadd.xlane.f32.xlu0 %v443
        %v445 = vpop.xlane.xlu0 %444
        %v446 = vmul.f32 %v445, 0.032258064
        %v447 = vrsqrt.pop %v446
        %v448 = vmul.f32 %v446, %v447
        %vm449 = vcmp.eq.f32.partialorder %v446, inf
        %v450 = vsel %vm449, %v446, %v448
        %vm451 = vcmp.eq.f32.partialorder %v446, 0.0
        %v452 = vand.u32 %v446, 2147483648
        %v453 = vsel %vm451, %v452, %v450
        %v454 = vadd.f32 %v453, 1e-06
        %v455 = vrcp.pop %v454
        %v456 = vmul.f32 1.0, %v455
        %v457 = vld [vmem:[#allocation7] sm:$0x1]
        %v458 = vmul.f32 %v441, %v456
        %v460 = vlaneseq
        %v461 = vshrl.u32 %v460, 7
        %v462 = vsub.s32 0, %v461
        %v463 = vrot.slane %v457, %v462
        %v465 = vmul.f32 %v463, %v458
        %v466 = vld [vmem:[#allocation8] sm:$0x1]
        %v468 = vlaneseq
        %v469 = vshrl.u32 %v468, 7
        %v470 = vsub.s32 0, %v469
        %v471 = vrot.slane %v466, %v470
        %v473 = vadd.f32 %v465, %v471
        %v474 = vld [vmem:[#allocation10] sm:$0xff]
        %v475 = vld [vmem:[#allocation10 + $0x8] sm:$0xff]
        %v476 = vld [vmem:[#allocation10 + $0x10] sm:$0xff]
        %v477 = vld [vmem:[#allocation10 + $0x18] sm:$0xff]
        %v478 = vld [vmem:[#allocation11] sm:$0x1]
        %v480 = vlaneseq
        %v481 = vshrl.u32 %v480, 7
        %v482 = vsub.s32 0, %v481
        %v483 = vrot.slane %v478, %v482
        %v486 = vsel %vm435, %v473, 0
        %488 = vmatprep.subr.mxu0 0.0
        %489 = vmatpush1.msra.mxu0 %v474
        %490 = vmatprep.subr.mxu0 0.0
        %491 = vmatpush1.msra.mxu0 %v475
        %492 = vmatprep.subr.mxu0 0.0
        %493 = vmatpush1.msra.mxu0 %v476
        %494 = vmatprep.subr.mxu0 0.0
        %495 = vmatpush1.msra.mxu0 %v477
        %496 = vmatprep.subr.mxu0 0.0
        %497 = vmatpush1.msra.mxu0 0.0
        %498 = vmatprep.subr.mxu0 0.0
        %499 = vmatpush1.msra.mxu0 0.0
        %500 = vmatprep.subr.mxu0 0.0
        %501 = vmatpush1.msra.mxu0 0.0
        %502 = vmatprep.subr.mxu0 0.0
        %503 = vmatpush1.msra.mxu0 0.0
        %504 = vmatprep.subr.mxu0 0.0
        %505 = vmatpush1.msra.mxu0 0.0
        %506 = vmatprep.subr.mxu0 0.0
        %507 = vmatpush1.msra.mxu0 0.0
        %508 = vmatprep.subr.mxu0 0.0
        %509 = vmatpush1.msra.mxu0 0.0
        %510 = vmatprep.subr.mxu0 0.0
        %511 = vmatpush1.msra.mxu0 0.0
        %512 = vmatprep.subr.mxu0 0.0
        %513 = vmatpush1.msra.mxu0 0.0
        %514 = vmatprep.subr.mxu0 0.0
        %515 = vmatpush1.msra.mxu0 0.0
        %516 = vmatprep.subr.mxu0 0.0
        %517 = vmatpush1.msra.mxu0 0.0
        %518 = vmatprep.subr.mxu0 0.0
        %519 = vmatpush1.msra.mxu0 0.0
        %520 = vmatprep.subr.mxu0 0.0
        %521 = vmatpush1.msra.mxu0 0.0
        %522 = vmatprep.subr.mxu0 0.0
        %523 = vmatpush1.msra.mxu0 0.0
        %524 = vmatprep.subr.mxu0 0.0
        %525 = vmatpush1.msra.mxu0 0.0
        %526 = vmatprep.subr.mxu0 0.0
        %527 = vmatpush1.msra.mxu0 0.0
        %528 = vmatprep.subr.mxu0 0.0
        %529 = vmatpush1.msra.mxu0 0.0
        %530 = vmatprep.subr.mxu0 0.0
        %531 = vmatpush1.msra.mxu0 0.0
        %532 = vmatprep.subr.mxu0 0.0
        %533 = vmatpush1.msra.mxu0 0.0
        %534 = vmatprep.subr.mxu0 0.0
        %535 = vmatpush1.msra.mxu0 0.0
        %536 = vmatprep.subr.mxu0 0.0
        %537 = vmatpush1.msra.mxu0 0.0
        %538 = vmatprep.subr.mxu0 0.0
        %539 = vmatpush1.msra.mxu0 0.0
        %540 = vmatprep.subr.mxu0 0.0
        %541 = vmatpush1.msra.mxu0 0.0
        %542 = vmatprep.subr.mxu0 0.0
        %543 = vmatpush1.msra.mxu0 0.0
        %544 = vmatprep.subr.mxu0 0.0
        %545 = vmatpush1.msra.mxu0 0.0
        %546 = vmatprep.subr.mxu0 0.0
        %547 = vmatpush1.msra.mxu0 0.0
        %548 = vmatprep.subr.mxu0 0.0
        %549 = vmatpush1.msra.mxu0 0.0
        %550 = vmatprep.subr.mxu0 0.0
        %551 = vmatpush1.msra.mxu0 0.0
        %552 = vmatprep.mubr.f32.mxu0 0.0
        %553 = vmatmul.mubr.f32.gmra.mrb[0].mxu0 %v486
        %v554 = vpop.f32.mrb[0].mxu0
        %v555 = vadd.f32 %v483, %v554
        %v556 = vpop.f32.mrb[0].mxu0
        %557 = vdwg.mxu0
        %v558 = vld [vmem:[%s373] sm:$0x1]
        %vm559 = vcmp.eq.s32.totalorder %v558, 0
        %561 = vrot.lane.b32.xlu0 %v555, 96
        %v562 = vpop.permute.xlu0 %561
        %vm563 = vcmask 64512
        %v564 = vsel %vm563, %v555, 0
        %v566 = vsel %vm563, %v562, 0
        %568 = vmatprep.subr.mxu0 0.0
        %569 = vmatpush1.xpose.msra.mxu0 %v566
        %570 = vmatprep.subr.mxu0 0.0
        %571 = vmatpush1.xpose.msra.mxu0 0.0
        %572 = vmatprep.subr.mxu0 0.0
        %573 = vmatpush1.xpose.msra.mxu0 0.0
        %574 = vmatprep.subr.mxu0 0.0
        %575 = vmatpush1.xpose.msra.mxu0 0.0
        %576 = vmatprep.subr.mxu0 0.0
        %577 = vmatpush1.xpose.msra.mxu0 0.0
        %578 = vmatprep.subr.mxu0 0.0
        %579 = vmatpush1.xpose.msra.mxu0 0.0
        %580 = vmatprep.subr.mxu0 0.0
        %581 = vmatpush1.xpose.msra.mxu0 0.0
        %582 = vmatprep.subr.mxu0 0.0
        %583 = vmatpush1.xpose.msra.mxu0 0.0
        %584 = vmatprep.subr.mxu0 0.0
        %585 = vmatpush1.xpose.msra.mxu0 0.0
        %586 = vmatprep.subr.mxu0 0.0
        %587 = vmatpush1.xpose.msra.mxu0 0.0
        %588 = vmatprep.subr.mxu0 0.0
        %589 = vmatpush1.xpose.msra.mxu0 0.0
        %590 = vmatprep.subr.mxu0 0.0
        %591 = vmatpush1.xpose.msra.mxu0 0.0
        %592 = vmatprep.subr.mxu0 0.0
        %593 = vmatpush1.xpose.msra.mxu0 0.0
        %594 = vmatprep.subr.mxu0 0.0
        %595 = vmatpush1.xpose.msra.mxu0 0.0
        %596 = vmatprep.subr.mxu0 0.0
        %597 = vmatpush1.xpose.msra.mxu0 0.0
        %598 = vmatprep.subr.mxu0 0.0
        %599 = vmatpush1.xpose.msra.mxu0 0.0
        %600 = vmatprep.subr.mxu0 0.0
        %601 = vmatpush1.xpose.msra.mxu0 0.0
        %602 = vmatprep.subr.mxu0 0.0
        %603 = vmatpush1.xpose.msra.mxu0 0.0
        %604 = vmatprep.subr.mxu0 0.0
        %605 = vmatpush1.xpose.msra.mxu0 0.0
        %606 = vmatprep.subr.mxu0 0.0
        %607 = vmatpush1.xpose.msra.mxu0 0.0
        %608 = vmatprep.subr.mxu0 0.0
        %609 = vmatpush1.xpose.msra.mxu0 0.0
        %610 = vmatprep.subr.mxu0 0.0
        %611 = vmatpush1.xpose.msra.mxu0 0.0
        %612 = vmatprep.subr.mxu0 0.0
        %613 = vmatpush1.xpose.msra.mxu0 0.0
        %614 = vmatprep.subr.mxu0 0.0
        %615 = vmatpush1.xpose.msra.mxu0 0.0
        %616 = vmatprep.subr.mxu0 0.0
        %617 = vmatpush1.xpose.msra.mxu0 0.0
        %618 = vmatprep.subr.mxu0 0.0
        %619 = vmatpush1.xpose.msra.mxu0 0.0
        %620 = vmatprep.subr.mxu0 0.0
        %621 = vmatpush1.xpose.msra.mxu0 0.0
        %622 = vmatprep.subr.mxu0 0.0
        %623 = vmatpush1.xpose.msra.mxu0 0.0
        %624 = vmatprep.subr.mxu0 0.0
        %625 = vmatpush1.xpose.msra.mxu0 0.0
        %626 = vmatprep.subr.mxu0 0.0
        %627 = vmatpush1.xpose.msra.mxu0 0.0
        %628 = vmatprep.subr.mxu0 0.0
        %629 = vmatpush1.xpose.msra.mxu0 0.0
        %630 = vmatprep.subr.mxu0 0.0
        %631 = vmatpush1.xpose.msra.mxu0 0.0
        %632 = vmatprep.mubr.f32.mxu0 0.0
        %633 = vmatmul.mubr.f32.gmra.mrb[0].mxu0 %v564
        %v634 = vpop.f32.mrb[0].mxu0
        %v635 = vadd.f32 0.0, %v634
        %v636 = vpop.f32.mrb[0].mxu0
        %637 = vdwg.mxu0
        %v638 = vmul.f32 %v635, 0.35355338
        %v639 = vsel %vm559, 1, 0
        %v640 = vlaneseq
        %v641 = vshrl.u32 %v640, 7
        %v642 = vsub.s32 0, %v641
        %v643 = vrot.slane %v639, %v642
        %vm644 = vcmp.eq.s32.totalorder %v643, 1
        %v645 = vsel %vm644, -1e+09, %v638
        %v646 = vsel %vm563, %v645, -inf
        %647 = vmax.xlane.f32.xlu0 %v646
        %v648 = vpop.xlane.xlu0 %647
        %v649 = vsub.f32 %v645, %v648
        %v650 = vmul.f32 %v649, 1.442695
        %v651 = vpow.pop %v650
        %v652 = vsel %vm563, %v651, 0.0
        %653 = vadd.xlane.f32.xlu0 %v652
        %v654 = vpop.xlane.xlu0 %653
        %v655 = vrcp.pop %v654
        %v656 = vmul.f32 %v651, %v655
        %657 = vrot.lane.b32.xlu0 %v555, 64
        %v658 = vpop.permute.xlu0 %657
        %v661 = vsel %vm563, %v656, 0
        %663 = vmatprep.subr.mxu0 0.0
        %664 = vmatpush1.msra.mxu0 %v658
        %665 = vmatprep.subr.mxu0 0.0
        %666 = vmatpush1.msra.mxu0 0.0
        %667 = vmatprep.subr.mxu0 0.0
        %668 = vmatpush1.msra.mxu0 0.0
        %669 = vmatprep.subr.mxu0 0.0
        %670 = vmatpush1.msra.mxu0 0.0
        %671 = vmatprep.subr.mxu0 0.0
        %672 = vmatpush1.msra.mxu0 0.0
        %673 = vmatprep.subr.mxu0 0.0
        %674 = vmatpush1.msra.mxu0 0.0
        %675 = vmatprep.subr.mxu0 0.0
        %676 = vmatpush1.msra.mxu0 0.0
        %677 = vmatprep.subr.mxu0 0.0
        %678 = vmatpush1.msra.mxu0 0.0
        %679 = vmatprep.subr.mxu0 0.0
        %680 = vmatpush1.msra.mxu0 0.0
        %681 = vmatprep.subr.mxu0 0.0
        %682 = vmatpush1.msra.mxu0 0.0
        %683 = vmatprep.subr.mxu0 0.0
        %684 = vmatpush1.msra.mxu0 0.0
        %685 = vmatprep.subr.mxu0 0.0
        %686 = vmatpush1.msra.mxu0 0.0
        %687 = vmatprep.subr.mxu0 0.0
        %688 = vmatpush1.msra.mxu0 0.0
        %689 = vmatprep.subr.mxu0 0.0
        %690 = vmatpush1.msra.mxu0 0.0
        %691 = vmatprep.subr.mxu0 0.0
        %692 = vmatpush1.msra.mxu0 0.0
        %693 = vmatprep.subr.mxu0 0.0
        %694 = vmatpush1.msra.mxu0 0.0
        %695 = vmatprep.subr.mxu0 0.0
        %696 = vmatpush1.msra.mxu0 0.0
        %697 = vmatprep.subr.mxu0 0.0
        %698 = vmatpush1.msra.mxu0 0.0
        %699 = vmatprep.subr.mxu0 0.0
        %700 = vmatpush1.msra.mxu0 0.0
        %701 = vmatprep.subr.mxu0 0.0
        %702 = vmatpush1.msra.mxu0 0.0
        %703 = vmatprep.subr.mxu0 0.0
        %704 = vmatpush1.msra.mxu0 0.0
        %705 = vmatprep.subr.mxu0 0.0
        %706 = vmatpush1.msra.mxu0 0.0
        %707 = vmatprep.subr.mxu0 0.0
        %708 = vmatpush1.msra.mxu0 0.0
        %709 = vmatprep.subr.mxu0 0.0
        %710 = vmatpush1.msra.mxu0 0.0
        %711 = vmatprep.subr.mxu0 0.0
        %712 = vmatpush1.msra.mxu0 0.0
        %713 = vmatprep.subr.mxu0 0.0
        %714 = vmatpush1.msra.mxu0 0.0
        %715 = vmatprep.subr.mxu0 0.0
        %716 = vmatpush1.msra.mxu0 0.0
        %717 = vmatprep.subr.mxu0 0.0
        %718 = vmatpush1.msra.mxu0 0.0
        %719 = vmatprep.subr.mxu0 0.0
        %720 = vmatpush1.msra.mxu0 0.0
        %721 = vmatprep.subr.mxu0 0.0
        %722 = vmatpush1.msra.mxu0 0.0
        %723 = vmatprep.subr.mxu0 0.0
        %724 = vmatpush1.msra.mxu0 0.0
        %725 = vmatprep.subr.mxu0 0.0
        %726 = vmatpush1.msra.mxu0 0.0
        %727 = vmatprep.mubr.f32.mxu0 0.0
        %728 = vmatmul.mubr.f32.gmra.mrb[0].mxu0 %v661
        %v729 = vpop.f32.mrb[0].mxu0
        %v730 = vadd.f32 0.0, %v729
        %v731 = vpop.f32.mrb[0].mxu0
        %732 = vdwg.mxu0
        %733 = vrot.lane.b32.xlu0 %v555, 120
        %v734 = vpop.permute.xlu0 %733
        %735 = vrot.lane.b32.xlu0 %v555, 88
        %v736 = vpop.permute.xlu0 %735
        %v737 = vsel %vm563, %v734, 0
        %v739 = vsel %vm563, %v736, 0
        %741 = vmatprep.subr.mxu0 0.0
        %742 = vmatpush1.xpose.msra.mxu0 %v739
        %743 = vmatprep.subr.mxu0 0.0
        %744 = vmatpush1.xpose.msra.mxu0 0.0
        %745 = vmatprep.subr.mxu0 0.0
        %746 = vmatpush1.xpose.msra.mxu0 0.0
        %747 = vmatprep.subr.mxu0 0.0
        %748 = vmatpush1.xpose.msra.mxu0 0.0
        %749 = vmatprep.subr.mxu0 0.0
        %750 = vmatpush1.xpose.msra.mxu0 0.0
        %751 = vmatprep.subr.mxu0 0.0
        %752 = vmatpush1.xpose.msra.mxu0 0.0
        %753 = vmatprep.subr.mxu0 0.0
        %754 = vmatpush1.xpose.msra.mxu0 0.0
        %755 = vmatprep.subr.mxu0 0.0
        %756 = vmatpush1.xpose.msra.mxu0 0.0
        %757 = vmatprep.subr.mxu0 0.0
        %758 = vmatpush1.xpose.msra.mxu0 0.0
        %759 = vmatprep.subr.mxu0 0.0
        %760 = vmatpush1.xpose.msra.mxu0 0.0
        %761 = vmatprep.subr.mxu0 0.0
        %762 = vmatpush1.xpose.msra.mxu0 0.0
        %763 = vmatprep.subr.mxu0 0.0
        %764 = vmatpush1.xpose.msra.mxu0 0.0
        %765 = vmatprep.subr.mxu0 0.0
        %766 = vmatpush1.xpose.msra.mxu0 0.0
        %767 = vmatprep.subr.mxu0 0.0
        %768 = vmatpush1.xpose.msra.mxu0 0.0
        %769 = vmatprep.subr.mxu0 0.0
        %770 = vmatpush1.xpose.msra.mxu0 0.0
        %771 = vmatprep.subr.mxu0 0.0
        %772 = vmatpush1.xpose.msra.mxu0 0.0
        %773 = vmatprep.subr.mxu0 0.0
        %774 = vmatpush1.xpose.msra.mxu0 0.0
        %775 = vmatprep.subr.mxu0 0.0
        %776 = vmatpush1.xpose.msra.mxu0 0.0
        %777 = vmatprep.subr.mxu0 0.0
        %778 = vmatpush1.xpose.msra.mxu0 0.0
        %779 = vmatprep.subr.mxu0 0.0
        %780 = vmatpush1.xpose.msra.mxu0 0.0
        %781 = vmatprep.subr.mxu0 0.0
        %782 = vmatpush1.xpose.msra.mxu0 0.0
        %783 = vmatprep.subr.mxu0 0.0
        %784 = vmatpush1.xpose.msra.mxu0 0.0
        %785 = vmatprep.subr.mxu0 0.0
        %786 = vmatpush1.xpose.msra.mxu0 0.0
        %787 = vmatprep.subr.mxu0 0.0
        %788 = vmatpush1.xpose.msra.mxu0 0.0
        %789 = vmatprep.subr.mxu0 0.0
        %790 = vmatpush1.xpose.msra.mxu0 0.0
        %791 = vmatprep.subr.mxu0 0.0
        %792 = vmatpush1.xpose.msra.mxu0 0.0
        %793 = vmatprep.subr.mxu0 0.0
        %794 = vmatpush1.xpose.msra.mxu0 0.0
        %795 = vmatprep.subr.mxu0 0.0
        %796 = vmatpush1.xpose.msra.mxu0 0.0
        %797 = vmatprep.subr.mxu0 0.0
        %798 = vmatpush1.xpose.msra.mxu0 0.0
        %799 = vmatprep.subr.mxu0 0.0
        %800 = vmatpush1.xpose.msra.mxu0 0.0
        %801 = vmatprep.subr.mxu0 0.0
        %802 = vmatpush1.xpose.msra.mxu0 0.0
        %803 = vmatprep.subr.mxu0 0.0
        %804 = vmatpush1.xpose.msra.mxu0 0.0
        %805 = vmatprep.mubr.f32.mxu0 0.0
        %806 = vmatmul.mubr.f32.gmra.mrb[0].mxu0 %v737
        %v807 = vpop.f32.mrb[0].mxu0
        %v808 = vadd.f32 0.0, %v807
        %v809 = vpop.f32.mrb[0].mxu0
        %810 = vdwg.mxu0
        %v811 = vmul.f32 %v808, 0.35355338
        %v812 = vsel %vm644, -1e+09, %v811
        %v813 = vsel %vm563, %v812, -inf
        %814 = vmax.xlane.f32.xlu0 %v813
        %v815 = vpop.xlane.xlu0 %814
        %v816 = vsub.f32 %v812, %v815
        %v817 = vmul.f32 %v816, 1.442695
        %v818 = vpow.pop %v817
        %v819 = vsel %vm563, %v818, 0.0
        %820 = vadd.xlane.f32.xlu0 %v819
        %v821 = vpop.xlane.xlu0 %820
        %v822 = vrcp.pop %v821
        %v823 = vmul.f32 %v818, %v822
        %824 = vrot.lane.b32.xlu0 %v555, 56
        %v825 = vpop.permute.xlu0 %824
        %v828 = vsel %vm563, %v823, 0
        %830 = vmatprep.subr.mxu0 0.0
        %831 = vmatpush1.msra.mxu0 %v825
        %832 = vmatprep.subr.mxu0 0.0
        %833 = vmatpush1.msra.mxu0 0.0
        %834 = vmatprep.subr.mxu0 0.0
        %835 = vmatpush1.msra.mxu0 0.0
        %836 = vmatprep.subr.mxu0 0.0
        %837 = vmatpush1.msra.mxu0 0.0
        %838 = vmatprep.subr.mxu0 0.0
        %839 = vmatpush1.msra.mxu0 0.0
        %840 = vmatprep.subr.mxu0 0.0
        %841 = vmatpush1.msra.mxu0 0.0
        %842 = vmatprep.subr.mxu0 0.0
        %843 = vmatpush1.msra.mxu0 0.0
        %844 = vmatprep.subr.mxu0 0.0
        %845 = vmatpush1.msra.mxu0 0.0
        %846 = vmatprep.subr.mxu0 0.0
        %847 = vmatpush1.msra.mxu0 0.0
        %848 = vmatprep.subr.mxu0 0.0
        %849 = vmatpush1.msra.mxu0 0.0
        %850 = vmatprep.subr.mxu0 0.0
        %851 = vmatpush1.msra.mxu0 0.0
        %852 = vmatprep.subr.mxu0 0.0
        %853 = vmatpush1.msra.mxu0 0.0
        %854 = vmatprep.subr.mxu0 0.0
        %855 = vmatpush1.msra.mxu0 0.0
        %856 = vmatprep.subr.mxu0 0.0
        %857 = vmatpush1.msra.mxu0 0.0
        %858 = vmatprep.subr.mxu0 0.0
        %859 = vmatpush1.msra.mxu0 0.0
        %860 = vmatprep.subr.mxu0 0.0
        %861 = vmatpush1.msra.mxu0 0.0
        %862 = vmatprep.subr.mxu0 0.0
        %863 = vmatpush1.msra.mxu0 0.0
        %864 = vmatprep.subr.mxu0 0.0
        %865 = vmatpush1.msra.mxu0 0.0
        %866 = vmatprep.subr.mxu0 0.0
        %867 = vmatpush1.msra.mxu0 0.0
        %868 = vmatprep.subr.mxu0 0.0
        %869 = vmatpush1.msra.mxu0 0.0
        %870 = vmatprep.subr.mxu0 0.0
        %871 = vmatpush1.msra.mxu0 0.0
        %872 = vmatprep.subr.mxu0 0.0
        %873 = vmatpush1.msra.mxu0 0.0
        %874 = vmatprep.subr.mxu0 0.0
        %875 = vmatpush1.msra.mxu0 0.0
        %876 = vmatprep.subr.mxu0 0.0
        %877 = vmatpush1.msra.mxu0 0.0
        %878 = vmatprep.subr.mxu0 0.0
        %879 = vmatpush1.msra.mxu0 0.0
        %880 = vmatprep.subr.mxu0 0.0
        %881 = vmatpush1.msra.mxu0 0.0
        %882 = vmatprep.subr.mxu0 0.0
        %883 = vmatpush1.msra.mxu0 0.0
        %884 = vmatprep.subr.mxu0 0.0
        %885 = vmatpush1.msra.mxu0 0.0
        %886 = vmatprep.subr.mxu0 0.0
        %887 = vmatpush1.msra.mxu0 0.0
        %888 = vmatprep.subr.mxu0 0.0
        %889 = vmatpush1.msra.mxu0 0.0
        %890 = vmatprep.subr.mxu0 0.0
        %891 = vmatpush1.msra.mxu0 0.0
        %892 = vmatprep.subr.mxu0 0.0
        %893 = vmatpush1.msra.mxu0 0.0
        %894 = vmatprep.mubr.f32.mxu0 0.0
        %895 = vmatmul.mubr.f32.gmra.mrb[0].mxu0 %v828
        %v896 = vpop.f32.mrb[0].mxu0
        %v897 = vadd.f32 0.0, %v896
        %v898 = vpop.f32.mrb[0].mxu0
        %899 = vdwg.mxu0
        %900 = vrot.lane.b32.xlu0 %v555, 112
        %v901 = vpop.permute.xlu0 %900
        %902 = vrot.lane.b32.xlu0 %v555, 80
        %v903 = vpop.permute.xlu0 %902
        %v904 = vsel %vm563, %v901, 0
        %v906 = vsel %vm563, %v903, 0
        %908 = vmatprep.subr.mxu0 0.0
        %909 = vmatpush1.xpose.msra.mxu0 %v906
        %910 = vmatprep.subr.mxu0 0.0
        %911 = vmatpush1.xpose.msra.mxu0 0.0
        %912 = vmatprep.subr.mxu0 0.0
        %913 = vmatpush1.xpose.msra.mxu0 0.0
        %914 = vmatprep.subr.mxu0 0.0
        %915 = vmatpush1.xpose.msra.mxu0 0.0
        %916 = vmatprep.subr.mxu0 0.0
        %917 = vmatpush1.xpose.msra.mxu0 0.0
        %918 = vmatprep.subr.mxu0 0.0
        %919 = vmatpush1.xpose.msra.mxu0 0.0
        %920 = vmatprep.subr.mxu0 0.0
        %921 = vmatpush1.xpose.msra.mxu0 0.0
        %922 = vmatprep.subr.mxu0 0.0
        %923 = vmatpush1.xpose.msra.mxu0 0.0
        %924 = vmatprep.subr.mxu0 0.0
        %925 = vmatpush1.xpose.msra.mxu0 0.0
        %926 = vmatprep.subr.mxu0 0.0
        %927 = vmatpush1.xpose.msra.mxu0 0.0
        %928 = vmatprep.subr.mxu0 0.0
        %929 = vmatpush1.xpose.msra.mxu0 0.0
        %930 = vmatprep.subr.mxu0 0.0
        %931 = vmatpush1.xpose.msra.mxu0 0.0
        %932 = vmatprep.subr.mxu0 0.0
        %933 = vmatpush1.xpose.msra.mxu0 0.0
        %934 = vmatprep.subr.mxu0 0.0
        %935 = vmatpush1.xpose.msra.mxu0 0.0
        %936 = vmatprep.subr.mxu0 0.0
        %937 = vmatpush1.xpose.msra.mxu0 0.0
        %938 = vmatprep.subr.mxu0 0.0
        %939 = vmatpush1.xpose.msra.mxu0 0.0
        %940 = vmatprep.subr.mxu0 0.0
        %941 = vmatpush1.xpose.msra.mxu0 0.0
        %942 = vmatprep.subr.mxu0 0.0
        %943 = vmatpush1.xpose.msra.mxu0 0.0
        %944 = vmatprep.subr.mxu0 0.0
        %945 = vmatpush1.xpose.msra.mxu0 0.0
        %946 = vmatprep.subr.mxu0 0.0
        %947 = vmatpush1.xpose.msra.mxu0 0.0
        %948 = vmatprep.subr.mxu0 0.0
        %949 = vmatpush1.xpose.msra.mxu0 0.0
        %950 = vmatprep.subr.mxu0 0.0
        %951 = vmatpush1.xpose.msra.mxu0 0.0
        %952 = vmatprep.subr.mxu0 0.0
        %953 = vmatpush1.xpose.msra.mxu0 0.0
        %954 = vmatprep.subr.mxu0 0.0
        %955 = vmatpush1.xpose.msra.mxu0 0.0
        %956 = vmatprep.subr.mxu0 0.0
        %957 = vmatpush1.xpose.msra.mxu0 0.0
        %958 = vmatprep.subr.mxu0 0.0
        %959 = vmatpush1.xpose.msra.mxu0 0.0
        %960 = vmatprep.subr.mxu0 0.0
        %961 = vmatpush1.xpose.msra.mxu0 0.0
        %962 = vmatprep.subr.mxu0 0.0
        %963 = vmatpush1.xpose.msra.mxu0 0.0
        %964 = vmatprep.subr.mxu0 0.0
        %965 = vmatpush1.xpose.msra.mxu0 0.0
        %966 = vmatprep.subr.mxu0 0.0
        %967 = vmatpush1.xpose.msra.mxu0 0.0
        %968 = vmatprep.subr.mxu0 0.0
        %969 = vmatpush1.xpose.msra.mxu0 0.0
        %970 = vmatprep.subr.mxu0 0.0
        %971 = vmatpush1.xpose.msra.mxu0 0.0
        %972 = vmatprep.mubr.f32.mxu0 0.0
        %973 = vmatmul.mubr.f32.gmra.mrb[0].mxu0 %v904
        %v974 = vpop.f32.mrb[0].mxu0
        %v975 = vadd.f32 0.0, %v974
        %v976 = vpop.f32.mrb[0].mxu0
        %977 = vdwg.mxu0
        %v978 = vmul.f32 %v975, 0.35355338
        %v979 = vsel %vm644, -1e+09, %v978
        %v980 = vsel %vm563, %v979, -inf
        %981 = vmax.xlane.f32.xlu0 %v980
        %v982 = vpop.xlane.xlu0 %981
        %v983 = vsub.f32 %v979, %v982
        %v984 = vmul.f32 %v983, 1.442695
        %v985 = vpow.pop %v984
        %v986 = vsel %vm563, %v985, 0.0
        %987 = vadd.xlane.f32.xlu0 %v986
        %v988 = vpop.xlane.xlu0 %987
        %v989 = vrcp.pop %v988
        %v990 = vmul.f32 %v985, %v989
        %991 = vrot.lane.b32.xlu0 %v555, 48
        %v992 = vpop.permute.xlu0 %991
        %v995 = vsel %vm563, %v990, 0
        %997 = vmatprep.subr.mxu0 0.0
        %998 = vmatpush1.msra.mxu0 %v992
        %999 = vmatprep.subr.mxu0 0.0
        %1000 = vmatpush1.msra.mxu0 0.0
        %1001 = vmatprep.subr.mxu0 0.0
        %1002 = vmatpush1.msra.mxu0 0.0
        %1003 = vmatprep.subr.mxu0 0.0
        %1004 = vmatpush1.msra.mxu0 0.0
        %1005 = vmatprep.subr.mxu0 0.0
        %1006 = vmatpush1.msra.mxu0 0.0
        %1007 = vmatprep.subr.mxu0 0.0
        %1008 = vmatpush1.msra.mxu0 0.0
        %1009 = vmatprep.subr.mxu0 0.0
        %1010 = vmatpush1.msra.mxu0 0.0
        %1011 = vmatprep.subr.mxu0 0.0
        %1012 = vmatpush1.msra.mxu0 0.0
        %1013 = vmatprep.subr.mxu0 0.0
        %1014 = vmatpush1.msra.mxu0 0.0
        %1015 = vmatprep.subr.mxu0 0.0
        %1016 = vmatpush1.msra.mxu0 0.0
        %1017 = vmatprep.subr.mxu0 0.0
        %1018 = vmatpush1.msra.mxu0 0.0
        %1019 = vmatprep.subr.mxu0 0.0
        %1020 = vmatpush1.msra.mxu0 0.0
        %1021 = vmatprep.subr.mxu0 0.0
        %1022 = vmatpush1.msra.mxu0 0.0
        %1023 = vmatprep.subr.mxu0 0.0
        %1024 = vmatpush1.msra.mxu0 0.0
        %1025 = vmatprep.subr.mxu0 0.0
        %1026 = vmatpush1.msra.mxu0 0.0
        %1027 = vmatprep.subr.mxu0 0.0
        %1028 = vmatpush1.msra.mxu0 0.0
        %1029 = vmatprep.subr.mxu0 0.0
        %1030 = vmatpush1.msra.mxu0 0.0
        %1031 = vmatprep.subr.mxu0 0.0
        %1032 = vmatpush1.msra.mxu0 0.0
        %1033 = vmatprep.subr.mxu0 0.0
        %1034 = vmatpush1.msra.mxu0 0.0
        %1035 = vmatprep.subr.mxu0 0.0
        %1036 = vmatpush1.msra.mxu0 0.0
        %1037 = vmatprep.subr.mxu0 0.0
        %1038 = vmatpush1.msra.mxu0 0.0
        %1039 = vmatprep.subr.mxu0 0.0
        %1040 = vmatpush1.msra.mxu0 0.0
        %1041 = vmatprep.subr.mxu0 0.0
        %1042 = vmatpush1.msra.mxu0 0.0
        %1043 = vmatprep.subr.mxu0 0.0
        %1044 = vmatpush1.msra.mxu0 0.0
        %1045 = vmatprep.subr.mxu0 0.0
        %1046 = vmatpush1.msra.mxu0 0.0
        %1047 = vmatprep.subr.mxu0 0.0
        %1048 = vmatpush1.msra.mxu0 0.0
        %1049 = vmatprep.subr.mxu0 0.0
        %1050 = vmatpush1.msra.mxu0 0.0
        %1051 = vmatprep.subr.mxu0 0.0
        %1052 = vmatpush1.msra.mxu0 0.0
        %1053 = vmatprep.subr.mxu0 0.0
        %1054 = vmatpush1.msra.mxu0 0.0
        %1055 = vmatprep.subr.mxu0 0.0
        %1056 = vmatpush1.msra.mxu0 0.0
        %1057 = vmatprep.subr.mxu0 0.0
        %1058 = vmatpush1.msra.mxu0 0.0
        %1059 = vmatprep.subr.mxu0 0.0
        %1060 = vmatpush1.msra.mxu0 0.0
        %1061 = vmatprep.mubr.f32.mxu0 0.0
        %1062 = vmatmul.mubr.f32.gmra.mrb[0].mxu0 %v995
        %v1063 = vpop.f32.mrb[0].mxu0
        %v1064 = vadd.f32 0.0, %v1063
        %v1065 = vpop.f32.mrb[0].mxu0
        %1066 = vdwg.mxu0
        %1067 = vrot.lane.b32.xlu0 %v555, 104
        %v1068 = vpop.permute.xlu0 %1067
        %1069 = vrot.lane.b32.xlu0 %v555, 72
        %v1070 = vpop.permute.xlu0 %1069
        %v1071 = vsel %vm563, %v1068, 0
        %v1073 = vsel %vm563, %v1070, 0
        %1075 = vmatprep.subr.mxu0 0.0
        %1076 = vmatpush1.xpose.msra.mxu0 %v1073
        %1077 = vmatprep.subr.mxu0 0.0
        %1078 = vmatpush1.xpose.msra.mxu0 0.0
        %1079 = vmatprep.subr.mxu0 0.0
        %1080 = vmatpush1.xpose.msra.mxu0 0.0
        %1081 = vmatprep.subr.mxu0 0.0
        %1082 = vmatpush1.xpose.msra.mxu0 0.0
        %1083 = vmatprep.subr.mxu0 0.0
        %1084 = vmatpush1.xpose.msra.mxu0 0.0
        %1085 = vmatprep.subr.mxu0 0.0
        %1086 = vmatpush1.xpose.msra.mxu0 0.0
        %1087 = vmatprep.subr.mxu0 0.0
        %1088 = vmatpush1.xpose.msra.mxu0 0.0
        %1089 = vmatprep.subr.mxu0 0.0
        %1090 = vmatpush1.xpose.msra.mxu0 0.0
        %1091 = vmatprep.subr.mxu0 0.0
        %1092 = vmatpush1.xpose.msra.mxu0 0.0
        %1093 = vmatprep.subr.mxu0 0.0
        %1094 = vmatpush1.xpose.msra.mxu0 0.0
        %1095 = vmatprep.subr.mxu0 0.0
        %1096 = vmatpush1.xpose.msra.mxu0 0.0
        %1097 = vmatprep.subr.mxu0 0.0
        %1098 = vmatpush1.xpose.msra.mxu0 0.0
        %1099 = vmatprep.subr.mxu0 0.0
        %1100 = vmatpush1.xpose.msra.mxu0 0.0
        %1101 = vmatprep.subr.mxu0 0.0
        %1102 = vmatpush1.xpose.msra.mxu0 0.0
        %1103 = vmatprep.subr.mxu0 0.0
        %1104 = vmatpush1.xpose.msra.mxu0 0.0
        %1105 = vmatprep.subr.mxu0 0.0
        %1106 = vmatpush1.xpose.msra.mxu0 0.0
        %1107 = vmatprep.subr.mxu0 0.0
        %1108 = vmatpush1.xpose.msra.mxu0 0.0
        %1109 = vmatprep.subr.mxu0 0.0
        %1110 = vmatpush1.xpose.msra.mxu0 0.0
        %1111 = vmatprep.subr.mxu0 0.0
        %1112 = vmatpush1.xpose.msra.mxu0 0.0
        %1113 = vmatprep.subr.mxu0 0.0
        %1114 = vmatpush1.xpose.msra.mxu0 0.0
        %1115 = vmatprep.subr.mxu0 0.0
        %1116 = vmatpush1.xpose.msra.mxu0 0.0
        %1117 = vmatprep.subr.mxu0 0.0
        %1118 = vmatpush1.xpose.msra.mxu0 0.0
        %1119 = vmatprep.subr.mxu0 0.0
        %1120 = vmatpush1.xpose.msra.mxu0 0.0
        %1121 = vmatprep.subr.mxu0 0.0
        %1122 = vmatpush1.xpose.msra.mxu0 0.0
        %1123 = vmatprep.subr.mxu0 0.0
        %1124 = vmatpush1.xpose.msra.mxu0 0.0
        %1125 = vmatprep.subr.mxu0 0.0
        %1126 = vmatpush1.xpose.msra.mxu0 0.0
        %1127 = vmatprep.subr.mxu0 0.0
        %1128 = vmatpush1.xpose.msra.mxu0 0.0
        %1129 = vmatprep.subr.mxu0 0.0
        %1130 = vmatpush1.xpose.msra.mxu0 0.0
        %1131 = vmatprep.subr.mxu0 0.0
        %1132 = vmatpush1.xpose.msra.mxu0 0.0
        %1133 = vmatprep.subr.mxu0 0.0
        %1134 = vmatpush1.xpose.msra.mxu0 0.0
        %1135 = vmatprep.subr.mxu0 0.0
        %1136 = vmatpush1.xpose.msra.mxu0 0.0
        %1137 = vmatprep.subr.mxu0 0.0
        %1138 = vmatpush1.xpose.msra.mxu0 0.0
        %1139 = vmatprep.mubr.f32.mxu0 0.0
        %1140 = vmatmul.mubr.f32.gmra.mrb[0].mxu0 %v1071
        %v1141 = vpop.f32.mrb[0].mxu0
        %v1142 = vadd.f32 0.0, %v1141
        %v1143 = vpop.f32.mrb[0].mxu0
        %1144 = vdwg.mxu0
        %v1145 = vmul.f32 %v1142, 0.35355338
        %v1146 = vsel %vm644, -1e+09, %v1145
        %v1147 = vsel %vm563, %v1146, -inf
        %1148 = vmax.xlane.f32.xlu0 %v1147
        %v1149 = vpop.xlane.xlu0 %1148
        %v1150 = vsub.f32 %v1146, %v1149
        %v1151 = vmul.f32 %v1150, 1.442695
        %v1152 = vpow.pop %v1151
        %v1153 = vsel %vm563, %v1152, 0.0
        %1154 = vadd.xlane.f32.xlu0 %v1153
        %v1155 = vpop.xlane.xlu0 %1154
        %v1156 = vrcp.pop %v1155
        %v1157 = vmul.f32 %v1152, %v1156
        %1158 = vrot.lane.b32.xlu0 %v555, 40
        %v1159 = vpop.permute.xlu0 %1158
        %v1162 = vsel %vm563, %v1157, 0
        %1164 = vmatprep.subr.mxu0 0.0
        %1165 = vmatpush1.msra.mxu0 %v1159
        %1166 = vmatprep.subr.mxu0 0.0
        %1167 = vmatpush1.msra.mxu0 0.0
        %1168 = vmatprep.subr.mxu0 0.0
        %1169 = vmatpush1.msra.mxu0 0.0
        %1170 = vmatprep.subr.mxu0 0.0
        %1171 = vmatpush1.msra.mxu0 0.0
        %1172 = vmatprep.subr.mxu0 0.0
        %1173 = vmatpush1.msra.mxu0 0.0
        %1174 = vmatprep.subr.mxu0 0.0
        %1175 = vmatpush1.msra.mxu0 0.0
        %1176 = vmatprep.subr.mxu0 0.0
        %1177 = vmatpush1.msra.mxu0 0.0
        %1178 = vmatprep.subr.mxu0 0.0
        %1179 = vmatpush1.msra.mxu0 0.0
        %1180 = vmatprep.subr.mxu0 0.0
        %1181 = vmatpush1.msra.mxu0 0.0
        %1182 = vmatprep.subr.mxu0 0.0
        %1183 = vmatpush1.msra.mxu0 0.0
        %1184 = vmatprep.subr.mxu0 0.0
        %1185 = vmatpush1.msra.mxu0 0.0
        %1186 = vmatprep.subr.mxu0 0.0
        %1187 = vmatpush1.msra.mxu0 0.0
        %1188 = vmatprep.subr.mxu0 0.0
        %1189 = vmatpush1.msra.mxu0 0.0
        %1190 = vmatprep.subr.mxu0 0.0
        %1191 = vmatpush1.msra.mxu0 0.0
        %1192 = vmatprep.subr.mxu0 0.0
        %1193 = vmatpush1.msra.mxu0 0.0
        %1194 = vmatprep.subr.mxu0 0.0
        %1195 = vmatpush1.msra.mxu0 0.0
        %1196 = vmatprep.subr.mxu0 0.0
        %1197 = vmatpush1.msra.mxu0 0.0
        %1198 = vmatprep.subr.mxu0 0.0
        %1199 = vmatpush1.msra.mxu0 0.0
        %1200 = vmatprep.subr.mxu0 0.0
        %1201 = vmatpush1.msra.mxu0 0.0
        %1202 = vmatprep.subr.mxu0 0.0
        %1203 = vmatpush1.msra.mxu0 0.0
        %1204 = vmatprep.subr.mxu0 0.0
        %1205 = vmatpush1.msra.mxu0 0.0
        %1206 = vmatprep.subr.mxu0 0.0
        %1207 = vmatpush1.msra.mxu0 0.0
        %1208 = vmatprep.subr.mxu0 0.0
        %1209 = vmatpush1.msra.mxu0 0.0
        %1210 = vmatprep.subr.mxu0 0.0
        %1211 = vmatpush1.msra.mxu0 0.0
        %1212 = vmatprep.subr.mxu0 0.0
        %1213 = vmatpush1.msra.mxu0 0.0
        %1214 = vmatprep.subr.mxu0 0.0
        %1215 = vmatpush1.msra.mxu0 0.0
        %1216 = vmatprep.subr.mxu0 0.0
        %1217 = vmatpush1.msra.mxu0 0.0
        %1218 = vmatprep.subr.mxu0 0.0
        %1219 = vmatpush1.msra.mxu0 0.0
        %1220 = vmatprep.subr.mxu0 0.0
        %1221 = vmatpush1.msra.mxu0 0.0
        %1222 = vmatprep.subr.mxu0 0.0
        %1223 = vmatpush1.msra.mxu0 0.0
        %1224 = vmatprep.subr.mxu0 0.0
        %1225 = vmatpush1.msra.mxu0 0.0
        %1226 = vmatprep.subr.mxu0 0.0
        %1227 = vmatpush1.msra.mxu0 0.0
        %1228 = vmatprep.mubr.f32.mxu0 0.0
        %1229 = vmatmul.mubr.f32.gmra.mrb[0].mxu0 %v1162
        %v1230 = vpop.f32.mrb[0].mxu0
        %v1231 = vadd.f32 0.0, %v1230
        %v1232 = vpop.f32.mrb[0].mxu0
        %1233 = vdwg.mxu0
        %1235 = vrot.lane.b32.xlu0 %v897, 8
        %v1236 = vpop.permute.xlu0 %1235
        %1239 = vrot.lane.b32.xlu0 %v1064, 16
        %v1240 = vpop.permute.xlu0 %1239
        %1243 = vrot.lane.b32.xlu0 %v1231, 24
        %v1244 = vpop.permute.xlu0 %1243
        %v1246 = vsel %vm563, %v730, %v1236
        %vm1247 = vcmask 130048
        %v1248 = vsel %vm1247, %v1246, %v1240
        %vm1249 = vcmask 195584
        %v1250 = vsel %vm1249, %v1248, %v1244
        %v1251 = vld [vmem:[#allocation13] sm:$0xff]
        %v1252 = vld [vmem:[#allocation13 + $0x8] sm:$0xff]
        %v1253 = vld [vmem:[#allocation13 + $0x10] sm:$0xff]
        %v1254 = vld [vmem:[#allocation13 + $0x18] sm:$0xff]
        %v1255 = vld [vmem:[#allocation14] sm:$0x1]
        %v1257 = vlaneseq
        %v1258 = vshrl.u32 %v1257, 7
        %v1259 = vsub.s32 0, %v1258
        %v1260 = vrot.slane %v1255, %v1259
        %v1263 = vsel %vm435, %v1250, 0
        %1265 = vmatprep.subr.mxu0 0.0
        %1266 = vmatpush1.msra.mxu0 %v1251
        %1267 = vmatprep.subr.mxu0 0.0
        %1268 = vmatpush1.msra.mxu0 %v1252
        %1269 = vmatprep.subr.mxu0 0.0
        %1270 = vmatpush1.msra.mxu0 %v1253
        %1271 = vmatprep.subr.mxu0 0.0
        %1272 = vmatpush1.msra.mxu0 %v1254
        %1273 = vmatprep.subr.mxu0 0.0
        %1274 = vmatpush1.msra.mxu0 0.0
        %1275 = vmatprep.subr.mxu0 0.0
        %1276 = vmatpush1.msra.mxu0 0.0
        %1277 = vmatprep.subr.mxu0 0.0
        %1278 = vmatpush1.msra.mxu0 0.0
        %1279 = vmatprep.subr.mxu0 0.0
        %1280 = vmatpush1.msra.mxu0 0.0
        %1281 = vmatprep.subr.mxu0 0.0
        %1282 = vmatpush1.msra.mxu0 0.0
        %1283 = vmatprep.subr.mxu0 0.0
        %1284 = vmatpush1.msra.mxu0 0.0
        %1285 = vmatprep.subr.mxu0 0.0
        %1286 = vmatpush1.msra.mxu0 0.0
        %1287 = vmatprep.subr.mxu0 0.0
        %1288 = vmatpush1.msra.mxu0 0.0
        %1289 = vmatprep.subr.mxu0 0.0
        %1290 = vmatpush1.msra.mxu0 0.0
        %1291 = vmatprep.subr.mxu0 0.0
        %1292 = vmatpush1.msra.mxu0 0.0
        %1293 = vmatprep.subr.mxu0 0.0
        %1294 = vmatpush1.msra.mxu0 0.0
        %1295 = vmatprep.subr.mxu0 0.0
        %1296 = vmatpush1.msra.mxu0 0.0
        %1297 = vmatprep.subr.mxu0 0.0
        %1298 = vmatpush1.msra.mxu0 0.0
        %1299 = vmatprep.subr.mxu0 0.0
        %1300 = vmatpush1.msra.mxu0 0.0
        %1301 = vmatprep.subr.mxu0 0.0
        %1302 = vmatpush1.msra.mxu0 0.0
        %1303 = vmatprep.subr.mxu0 0.0
        %1304 = vmatpush1.msra.mxu0 0.0
        %1305 = vmatprep.subr.mxu0 0.0
        %1306 = vmatpush1.msra.mxu0 0.0
        %1307 = vmatprep.subr.mxu0 0.0
        %1308 = vmatpush1.msra.mxu0 0.0
        %1309 = vmatprep.subr.mxu0 0.0
        %1310 = vmatpush1.msra.mxu0 0.0
        %1311 = vmatprep.subr.mxu0 0.0
        %1312 = vmatpush1.msra.mxu0 0.0
        %1313 = vmatprep.subr.mxu0 0.0
        %1314 = vmatpush1.msra.mxu0 0.0
        %1315 = vmatprep.subr.mxu0 0.0
        %1316 = vmatpush1.msra.mxu0 0.0
        %1317 = vmatprep.subr.mxu0 0.0
        %1318 = vmatpush1.msra.mxu0 0.0
        %1319 = vmatprep.subr.mxu0 0.0
        %1320 = vmatpush1.msra.mxu0 0.0
        %1321 = vmatprep.subr.mxu0 0.0
        %1322 = vmatpush1.msra.mxu0 0.0
        %1323 = vmatprep.subr.mxu0 0.0
        %1324 = vmatpush1.msra.mxu0 0.0
        %1325 = vmatprep.subr.mxu0 0.0
        %1326 = vmatpush1.msra.mxu0 0.0
        %1327 = vmatprep.subr.mxu0 0.0
        %1328 = vmatpush1.msra.mxu0 0.0
        %1329 = vmatprep.mubr.f32.mxu0 0.0
        %1330 = vmatmul.mubr.f32.gmra.mrb[0].mxu0 %v1263
        %v1331 = vpop.f32.mrb[0].mxu0
        %v1332 = vadd.f32 %v1260, %v1331
        %v1333 = vpop.f32.mrb[0].mxu0
        %1334 = vdwg.mxu0
        %v1335 = vadd.f32 %v434, %v1332
        %1336 = vst.msk [vmem:[%s433] sm:$0xff] %vm435, %v1335
        %s1337 = sand.u32 %s217, 1
        %s1338 = scalar_lea.sflag [#allocation4], %s1337
        %s1339 = sand.u32 %s217, 1
        %s1340 = smul.addr %s1339, 8
        %s1341 = scalar_lea.vmem [#allocation16], %s1340
        // Predicated region
        $region85: #{tpu_custom_call.1} parent=51 // pred_check
          %p1342 = pneg %p227
        $region86: #{tpu_custom_call.1} parent=51 // pred_check_branch
          %1344 = sbr.rel (%p1342) target = $region88
        $region87: #{tpu_custom_call.1} parent=51 // pred_region
          %s1346 = ssub.s32 128, 128
          %1347 = vsyncadd %s1338, %s1346
          %s1348 = smul.addr %s31, 128
          %s1349 = scalar_lea.hbm %s8, %s1348
          %s1351 = sshll.u32 %s1341, 4
          %s1352 = int_to_ptr.vmem [resolvable:$true] %s1351
          %1354 = dma.vmem_to_hbm [thread:$0]  %s1352, 128, %s1349, %s1338
        $region88: #{tpu_custom_call.1} parent=51 // pred_fallthru
          _
      $region52: #{tpu_custom_call.1} parent=5 // pred_fallthru
        _
      %p1355 = scmp.le.s32.totalorder 2, %s26
      // Predicated region
      $region89: #{tpu_custom_call.1} parent=5 // pred_check
        %p1356 = pneg %p1355
      $region90: #{tpu_custom_call.1} parent=5 // pred_check_branch
        %1358 = sbr.rel (%p1356) target = $region92
      $region91: #{tpu_custom_call.1} parent=5 // pred_region
        %s1359 = ssub.s32 %s26, 2
        // Predicated region
        $region93: #{tpu_custom_call.1} parent=91 // pred_check
          %p1360 = pneg %p233
        $region94: #{tpu_custom_call.1} parent=91 // pred_check_branch
          %1362 = sbr.rel (%p1360) target = $region96
        $region95: #{tpu_custom_call.1} parent=91 // pred_region
          %s1363 = sand.u32 %s218, 1
          %s1364 = scalar_lea.sflag [#allocation4], %s1363
          %s1365 = sand.u32 %s218, 1
          %s1366 = smul.addr %s1365, 8
          %s1367 = scalar_lea.vmem [#allocation16], %s1366
          %1368 = dma.done %s1364, 128
        $region96: #{tpu_custom_call.1} parent=91 // pred_fallthru
          _
      $region92: #{tpu_custom_call.1} parent=5 // pred_fallthru
        _
    $region6: #{tpu_custom_call.1} parent=1 // loop_footer
      %s30 = sadd.s32 1, %s26
    $region7: #{tpu_custom_call.1} parent=1 // loop_footer_branch
      %25 = sbr.rel target = $region3
    $region8: #{tpu_custom_call.1} parent=1 // loop_exit
      _
    %1369 = vsyncpa [#allocation3], 1
    %s1370 = scalar_lea.sflag [#allocation3], 1
    %1371 = vsyncpa %s1370, 1
    %1372 = vsyncpa [#allocation6], 1
    %s1373 = scalar_lea.sflag [#allocation6], 1
    %1374 = vsyncpa %s1373, 1
    %1375 = vsyncpa [#allocation9], 1
    %1376 = vsyncpa [#allocation12], 1
    %1377 = vsyncpa [#allocation15], 1
    %1378 = vsyncpa [#allocation4], 1
    %s1379 = scalar_lea.sflag [#allocation4], 1
    %1380 = vsyncpa %s1379, 1

</llo_original>
